<compile_context>
chip_gen: v5e
topology: v5e:2x2
jax: 0.10.0
libtpu: 0.0.40
codegen_flags: <defaults>
</compile_context>

<pallas_src>
import math
import functools

import jax
import jax.numpy as jnp
from jax.experimental import pallas as pl
from jax.experimental.pallas import tpu as pltpu


VMEM_LIMIT_BYTES = 32 * 1024 * 1024


# ----------------------------- in-kernel helpers ----------------------------

def _layer_norm(z, gamma, beta):
    """f32 LayerNorm over the last dim (eps matches nn.LayerNorm default)."""
    mean = jnp.mean(z, axis=-1, keepdims=True)
    var = jnp.mean((z - mean) ** 2, axis=-1, keepdims=True)
    return (z - mean) * jax.lax.rsqrt(var + 1e-5) * gamma + beta


def _mha_sub(xq, xkv, refs, num_heads):
    """Multi-head attention for one batch element.

    xq: (Sq, D) f32, xkv: (Sk, D) f32.  refs = (wq, bq, wk, bk, wv, bv, wo, bo, ...).
    wq/bq already carry the 1/sqrt(Dh) softmax scale (folded at pack time).
    """
    wq, bq = refs[0][...], refs[1][...]
    wk, bk = refs[2][...], refs[3][...]
    wv, bv = refs[4][...], refs[5][...]
    wo, bo = refs[6][...], refs[7][...]
    cdt = wq.dtype

    q = jnp.dot(xq.astype(cdt), wq, preferred_element_type=jnp.float32) + bq   # (Sq, D)
    k = jnp.dot(xkv.astype(cdt), wk, preferred_element_type=jnp.float32) + bk  # (Sk, D)
    v = jnp.dot(xkv.astype(cdt), wv, preferred_element_type=jnp.float32) + bv  # (Sk, D)

    sq, d = xq.shape
    dh = d // num_heads
    # contract last dims of q and k (q @ k^T) without materializing a transpose
    dn = (((1,), (1,)), ((), ()))

    ctx_parts = []
    for h in range(num_heads):                      # statically unrolled over heads
        sl = slice(h * dh, (h + 1) * dh)
        s = jax.lax.dot_general(q[:, sl].astype(cdt), k[:, sl].astype(cdt), dn,
                                preferred_element_type=jnp.float32)            # (Sq, Sk)
        m = jnp.max(s, axis=-1, keepdims=True)
        e = jnp.exp(s - m)
        p = e * pl.reciprocal(jnp.sum(e, axis=-1, keepdims=True), approx=True)
        ctx_parts.append(jnp.dot(p.astype(cdt), v[:, sl].astype(cdt),
                                 preferred_element_type=jnp.float32))          # (Sq, Dh)

    # Concatenate head contexts along lanes, then ONE out-projection matmul (K = D).
    ctx = jnp.concatenate(ctx_parts, axis=-1)                                  # (Sq, D)
    return jnp.dot(ctx.astype(cdt), wo, preferred_element_type=jnp.float32) + bo


def _ffn_sub(x, refs):
    """Linear -> ReLU -> Linear (dropout = identity)."""
    w1, b1, w2, b2 = refs[0][...], refs[1][...], refs[2][...], refs[3][...]
    cdt = w1.dtype
    h = jnp.dot(x.astype(cdt), w1, preferred_element_type=jnp.float32) + b1
    h = jnp.maximum(h, 0.0)
    return jnp.dot(h.astype(cdt), w2, preferred_element_type=jnp.float32) + b2


# ------------------------------ fused kernel --------------------------------

def _attention_layer_kernel(*refs, num_heads, has_cross):
    """Whole AttentionLayer forward for one batch element, all VMEM-resident.

    refs = [xq, (xkv,)] + self_attn(10) + [cross_attn(10)] + ffn(6) + [out]
    where each attention param group is (wq, bq, wk, bk, wv, bv, wo, bo, gamma, beta)
    and the FFN group is (w1, b1, w2, b2, gamma, beta).
    """
    o_ref = refs[-1]
    if has_cross:
        xq_ref, xkv_ref = refs[0], refs[1]
        p = refs[2:-1]
        self_p, cross_p, ffn_p = p[:10], p[10:20], p[20:26]
    else:
        xq_ref, xkv_ref = refs[0], None
        p = refs[1:-1]
        self_p, cross_p, ffn_p = p[:10], None, p[10:16]

    x = xq_ref[0]                                                              # (Sq, D) f32

    # self-attention + residual + LayerNorm
    x = _layer_norm(x + _mha_sub(x, x, self_p, num_heads),
                    self_p[8][...], self_p[9][...])

    # cross-attention + residual + LayerNorm
    if has_cross:
        xkv = xkv_ref[0]                                                       # (Sk, D) f32
        x = _layer_norm(x + _mha_sub(x, xkv, cross_p, num_heads),
                        cross_p[8][...], cross_p[9][...])

    # FFN + residual + LayerNorm, single lane-contiguous store per batch element
    x = _layer_norm(x + _ffn_sub(x, ffn_p), ffn_p[4][...], ffn_p[5][...])
    o_ref[0] = x


# -------------------------------- wrapper ------------------------------------

def _const_spec(arr):
    """Full-array block that stays resident across the 1-D grid (constant index_map)."""
    if arr.ndim == 2:
        return pl.BlockSpec(arr.shape, lambda b: (0, 0))
    raise ValueError("expected 2-D parameter array")


def _mha_param_list(mp, ln):
    return [mp["wq"], mp["bq"], mp["wk"], mp["bk"], mp["wv"], mp["bv"],
            mp["wo"], mp["bo"], ln["gamma"], ln["beta"]]


def _ffn_param_list(fp, ln):
    return [fp["w1"], fp["b1"], fp["w2"], fp["b2"], ln["gamma"], ln["beta"]]


def attention_layer_forward(x, cross_src, params, num_heads):
    """Mirrors AttentionLayer.forward (dropout = identity, no padding masks).
    One fused pallas_call, grid over batch."""
    B, Sq, D = x.shape
    has_cross = cross_src is not None

    operands = [x]
    x_spec = pl.BlockSpec((1, Sq, D), lambda b: (b, 0, 0))
    in_specs = [x_spec]
    if has_cross:
        Sk = cross_src.shape[1]
        operands.append(cross_src)
        in_specs.append(pl.BlockSpec((1, Sk, D), lambda b: (b, 0, 0)))

    plist = _mha_param_list(params["self_attn"], params["norm_self"])
    if has_cross:
        plist += _mha_param_list(params["cross_attn"], params["norm_cross"])
    plist += _ffn_param_list(params["ffn"], params["norm_ffn"])
    operands += plist
    in_specs += [_const_spec(a) for a in plist]

    kernel = functools.partial(_attention_layer_kernel,
                               num_heads=num_heads, has_cross=has_cross)

    return pl.pallas_call(
        kernel,
        out_shape=jax.ShapeDtypeStruct((B, Sq, D), jnp.float32),
        grid=(B,),
        in_specs=in_specs,
        out_specs=x_spec,
        compiler_params=pltpu.CompilerParams(
            dimension_semantics=("parallel",),       # v7x: one batch element per TC
            vmem_limit_bytes=VMEM_LIMIT_BYTES),
    )(*operands)


# --------------------------- parameter setup --------------------------------

def init_params(key, d_model, num_heads, dim_feedforward):
    """Raw parameters in PyTorch layout (out_features, in_features)."""
    ks = jax.random.split(key, 12)
    s = 0.05

    def mha_params(k0, k1, k2, k3):
        return {
            "in_w": s * jax.random.normal(k0, (3 * d_model, d_model), jnp.float32),
            "in_b": s * jax.random.normal(k1, (3 * d_model,), jnp.float32),
            "out_w": s * jax.random.normal(k2, (d_model, d_model), jnp.float32),
            "out_b": s * jax.random.normal(k3, (d_model,), jnp.float32),
        }

    def ln_params():
        return {"gamma": jnp.ones((d_model,), jnp.float32),
                "beta": jnp.zeros((d_model,), jnp.float32)}

    return {
        "self_attn": mha_params(ks[0], ks[1], ks[2], ks[3]),
        "cross_attn": mha_params(ks[4], ks[5], ks[6], ks[7]),
        "ffn_w1": s * jax.random.normal(ks[8], (dim_feedforward, d_model), jnp.float32),
        "ffn_b1": s * jax.random.normal(ks[9], (dim_feedforward,), jnp.float32),
        "ffn_w2": s * jax.random.normal(ks[10], (d_model, dim_feedforward), jnp.float32),
        "ffn_b2": s * jax.random.normal(ks[11], (d_model,), jnp.float32),
        "norm_self": ln_params(),
        "norm_cross": ln_params(),
        "norm_ffn": ln_params(),
    }


def pack_params(raw, num_heads, compute_dtype=jnp.bfloat16):
    """One-time conversion to kernel layout:
       * split the packed torch QKV weight FIRST, then transpose (N,K) -> (K,N),
       * fold the 1/sqrt(Dh) softmax scale into Wq and bq,
       * matmul weights in bf16 for the MXU, biases/LN params f32 as (1, D) rows."""
    d_model = raw["norm_self"]["gamma"].shape[0]
    scale = 1.0 / math.sqrt(d_model // num_heads)

    def t(w):
        return jnp.transpose(w).astype(compute_dtype)

    def rb(b):
        return b.reshape(1, -1).astype(jnp.float32)

    def pack_mha(p):
        wq, wk, wv = jnp.split(p["in_w"], 3, axis=0)   # torch packed layout: q | k | v
        bq, bk, bv = jnp.split(p["in_b"], 3, axis=0)
        return {"wq": (jnp.transpose(wq) * scale).astype(compute_dtype),  # scale folded in
                "bq": rb(bq * scale),
                "wk": t(wk), "bk": rb(bk),
                "wv": t(wv), "bv": rb(bv),
                "wo": t(p["out_w"]), "bo": rb(p["out_b"])}

    def pack_ln(p):
        return {"gamma": rb(p["gamma"]), "beta": rb(p["beta"])}

    return {
        "self_attn": pack_mha(raw["self_attn"]),
        "cross_attn": pack_mha(raw["cross_attn"]),
        "ffn": {"w1": t(raw["ffn_w1"]), "b1": rb(raw["ffn_b1"]),
                "w2": t(raw["ffn_w2"]), "b2": rb(raw["ffn_b2"])},
        "norm_self": pack_ln(raw["norm_self"]),
        "norm_cross": pack_ln(raw["norm_cross"]),
        "norm_ffn": pack_ln(raw["norm_ffn"]),
    }


# ------------------------- pure-JAX reference (f32) --------------------------

def reference_forward(x, cross_src, raw, num_heads):
    def mha(xq, xkv, p):
        B, Sq, D = xq.shape
        Sk = xkv.shape[1]
        H, Dh = num_heads, D // num_heads
        wq, wk, wv = jnp.split(p["in_w"], 3, axis=0)
        bq, bk, bv = jnp.split(p["in_b"], 3, axis=0)
        q = (xq @ wq.T + bq).reshape(B, Sq, H, Dh).transpose(0, 2, 1, 3)
        k = (xkv @ wk.T + bk).reshape(B, Sk, H, Dh).transpose(0, 2, 1, 3)
        v = (xkv @ wv.T + bv).reshape(B, Sk, H, Dh).transpose(0, 2, 1, 3)
        s = jnp.einsum("bhqd,bhkd->bhqk", q, k) / math.sqrt(Dh)
        a = jax.nn.softmax(s, axis=-1)
        ctx = jnp.einsum("bhqk,bhkd->bhqd", a, v).transpose(0, 2, 1, 3).reshape(B, Sq, D)
        return ctx @ p["out_w"].T + p["out_b"]

    def ln(z, p):
        mu = z.mean(-1, keepdims=True)
        var = ((z - mu) ** 2).mean(-1, keepdims=True)
        return (z - mu) / jnp.sqrt(var + 1e-5) * p["gamma"] + p["beta"]

    x = ln(x + mha(x, x, raw["self_attn"]), raw["norm_self"])
    if cross_src is not None:
        x = ln(x + mha(x, cross_src, raw["cross_attn"]), raw["norm_cross"])
    h = jnp.maximum(x @ raw["ffn_w1"].T + raw["ffn_b1"], 0.0)
    y = h @ raw["ffn_w2"].T + raw["ffn_b2"]
    return ln(x + y, raw["norm_ffn"])


# --------------------------------- main --------------------------------------

if __name__ == "__main__":
    d_model = 32
    num_heads = 4
    dim_feedforward = 64
    B, S, S_cross = 2, 8, 8

    key = jax.random.PRNGKey(0)
    k_x, k_c, k_p = jax.random.split(key, 3)

    x = jax.random.normal(k_x, (B, S, d_model), jnp.float32)
    cross_src = jax.random.normal(k_c, (B, S_cross, d_model), jnp.float32)

    raw = init_params(k_p, d_model, num_heads, dim_feedforward)
    # pre-transposed bf16 matmul weights; softmax scale folded into Wq/bq
    params = pack_params(raw, num_heads, compute_dtype=jnp.bfloat16)

    fwd = jax.jit(lambda xx, cc, pp: attention_layer_forward(xx, cc, pp, num_heads))
    out = jax.block_until_ready(fwd(x, cross_src, params))

    assert out.shape == (B, S, d_model)
    assert bool(jnp.all(jnp.isfinite(out)))

    # bf16 matmul weights + approx-reciprocal softmax vs f32 reference: loose tolerance.
    ref = reference_forward(x, cross_src, raw, num_heads)
    max_err = float(jnp.max(jnp.abs(out - ref)))
    assert max_err < 1e-1, f"mismatch vs f32 reference: max|diff|={max_err}"

    print("KERNEL_OK")
</pallas_src>

<mosaic_0001>
module attributes {stable_mosaic.version = 11 : i64} {
  func.func @_attention_layer_kernel(%arg0: i32, %arg1: memref<1x8x32xf32, #tpu.memory_space<vmem>>, %arg2: memref<1x8x32xf32, #tpu.memory_space<vmem>>, %arg3: memref<32x32xbf16, #tpu.memory_space<vmem>>, %arg4: memref<1x32xf32, #tpu.memory_space<vmem>>, %arg5: memref<32x32xbf16, #tpu.memory_space<vmem>>, %arg6: memref<1x32xf32, #tpu.memory_space<vmem>>, %arg7: memref<32x32xbf16, #tpu.memory_space<vmem>>, %arg8: memref<1x32xf32, #tpu.memory_space<vmem>>, %arg9: memref<32x32xbf16, #tpu.memory_space<vmem>>, %arg10: memref<1x32xf32, #tpu.memory_space<vmem>>, %arg11: memref<1x32xf32, #tpu.memory_space<vmem>>, %arg12: memref<1x32xf32, #tpu.memory_space<vmem>>, %arg13: memref<32x32xbf16, #tpu.memory_space<vmem>>, %arg14: memref<1x32xf32, #tpu.memory_space<vmem>>, %arg15: memref<32x32xbf16, #tpu.memory_space<vmem>>, %arg16: memref<1x32xf32, #tpu.memory_space<vmem>>, %arg17: memref<32x32xbf16, #tpu.memory_space<vmem>>, %arg18: memref<1x32xf32, #tpu.memory_space<vmem>>, %arg19: memref<32x32xbf16, #tpu.memory_space<vmem>>, %arg20: memref<1x32xf32, #tpu.memory_space<vmem>>, %arg21: memref<1x32xf32, #tpu.memory_space<vmem>>, %arg22: memref<1x32xf32, #tpu.memory_space<vmem>>, %arg23: memref<32x64xbf16, #tpu.memory_space<vmem>>, %arg24: memref<1x64xf32, #tpu.memory_space<vmem>>, %arg25: memref<64x32xbf16, #tpu.memory_space<vmem>>, %arg26: memref<1x32xf32, #tpu.memory_space<vmem>>, %arg27: memref<1x32xf32, #tpu.memory_space<vmem>>, %arg28: memref<1x32xf32, #tpu.memory_space<vmem>>, %arg29: memref<1x8x32xf32, #tpu.memory_space<vmem>>) attributes {dimension_semantics = [#tpu.dimension_semantics<parallel>], iteration_bounds = array<i64: 2>, scalar_prefetch = 0 : i64, scratch_operands = 0 : i64, tpu.core_type = #tpu.core_type<tc>, window_params = [{transform_indices = @transform_0, window_bounds = array<i64: 1, 8, 32>}, {transform_indices = @transform_1, window_bounds = array<i64: 1, 8, 32>}, {pipeline_mode = #tpu.pipeline_mode<synchronous>, transform_indices = @transform_2, window_bounds = array<i64: 32, 32>}, {pipeline_mode = #tpu.pipeline_mode<synchronous>, transform_indices = @transform_3, window_bounds = array<i64: 1, 32>}, {pipeline_mode = #tpu.pipeline_mode<synchronous>, transform_indices = @transform_4, window_bounds = array<i64: 32, 32>}, {pipeline_mode = #tpu.pipeline_mode<synchronous>, transform_indices = @transform_5, window_bounds = array<i64: 1, 32>}, {pipeline_mode = #tpu.pipeline_mode<synchronous>, transform_indices = @transform_6, window_bounds = array<i64: 32, 32>}, {pipeline_mode = #tpu.pipeline_mode<synchronous>, transform_indices = @transform_7, window_bounds = array<i64: 1, 32>}, {pipeline_mode = #tpu.pipeline_mode<synchronous>, transform_indices = @transform_8, window_bounds = array<i64: 32, 32>}, {pipeline_mode = #tpu.pipeline_mode<synchronous>, transform_indices = @transform_9, window_bounds = array<i64: 1, 32>}, {pipeline_mode = #tpu.pipeline_mode<synchronous>, transform_indices = @transform_10, window_bounds = array<i64: 1, 32>}, {pipeline_mode = #tpu.pipeline_mode<synchronous>, transform_indices = @transform_11, window_bounds = array<i64: 1, 32>}, {pipeline_mode = #tpu.pipeline_mode<synchronous>, transform_indices = @transform_12, window_bounds = array<i64: 32, 32>}, {pipeline_mode = #tpu.pipeline_mode<synchronous>, transform_indices = @transform_13, window_bounds = array<i64: 1, 32>}, {pipeline_mode = #tpu.pipeline_mode<synchronous>, transform_indices = @transform_14, window_bounds = array<i64: 32, 32>}, {pipeline_mode = #tpu.pipeline_mode<synchronous>, transform_indices = @transform_15, window_bounds = array<i64: 1, 32>}, {pipeline_mode = #tpu.pipeline_mode<synchronous>, transform_indices = @transform_16, window_bounds = array<i64: 32, 32>}, {pipeline_mode = #tpu.pipeline_mode<synchronous>, transform_indices = @transform_17, window_bounds = array<i64: 1, 32>}, {pipeline_mode = #tpu.pipeline_mode<synchronous>, transform_indices = @transform_18, window_bounds = array<i64: 32, 32>}, {pipeline_mode = #tpu.pipeline_mode<synchronous>, transform_indices = @transform_19, window_bounds = array<i64: 1, 32>}, {pipeline_mode = #tpu.pipeline_mode<synchronous>, transform_indices = @transform_20, window_bounds = array<i64: 1, 32>}, {pipeline_mode = #tpu.pipeline_mode<synchronous>, transform_indices = @transform_21, window_bounds = array<i64: 1, 32>}, {pipeline_mode = #tpu.pipeline_mode<synchronous>, transform_indices = @transform_22, window_bounds = array<i64: 32, 64>}, {pipeline_mode = #tpu.pipeline_mode<synchronous>, transform_indices = @transform_23, window_bounds = array<i64: 1, 64>}, {pipeline_mode = #tpu.pipeline_mode<synchronous>, transform_indices = @transform_24, window_bounds = array<i64: 64, 32>}, {pipeline_mode = #tpu.pipeline_mode<synchronous>, transform_indices = @transform_25, window_bounds = array<i64: 1, 32>}, {pipeline_mode = #tpu.pipeline_mode<synchronous>, transform_indices = @transform_26, window_bounds = array<i64: 1, 32>}, {pipeline_mode = #tpu.pipeline_mode<synchronous>, transform_indices = @transform_27, window_bounds = array<i64: 1, 32>}, {transform_indices = @transform_28, window_bounds = array<i64: 1, 8, 32>}]} {
    %c0 = arith.constant 0 : index
    %c0_0 = arith.constant 0 : index
    %c0_1 = arith.constant 0 : index
    %0 = vector.load %arg1[%c0, %c0_0, %c0_1] : memref<1x8x32xf32, #tpu.memory_space<vmem>>, vector<1x8x32xf32>
    %1 = vector.shape_cast %0 : vector<1x8x32xf32> to vector<8x32xf32>
    %c0_2 = arith.constant 0 : index
    %c0_3 = arith.constant 0 : index
    %2 = vector.load %arg3[%c0_2, %c0_3] : memref<32x32xbf16, #tpu.memory_space<vmem>>, vector<32x32xbf16>
    %c0_4 = arith.constant 0 : index
    %c0_5 = arith.constant 0 : index
    %3 = vector.load %arg4[%c0_4, %c0_5] : memref<1x32xf32, #tpu.memory_space<vmem>>, vector<1x32xf32>
    %c0_6 = arith.constant 0 : index
    %c0_7 = arith.constant 0 : index
    %4 = vector.load %arg5[%c0_6, %c0_7] : memref<32x32xbf16, #tpu.memory_space<vmem>>, vector<32x32xbf16>
    %c0_8 = arith.constant 0 : index
    %c0_9 = arith.constant 0 : index
    %5 = vector.load %arg6[%c0_8, %c0_9] : memref<1x32xf32, #tpu.memory_space<vmem>>, vector<1x32xf32>
    %c0_10 = arith.constant 0 : index
    %c0_11 = arith.constant 0 : index
    %6 = vector.load %arg7[%c0_10, %c0_11] : memref<32x32xbf16, #tpu.memory_space<vmem>>, vector<32x32xbf16>
    %c0_12 = arith.constant 0 : index
    %c0_13 = arith.constant 0 : index
    %7 = vector.load %arg8[%c0_12, %c0_13] : memref<1x32xf32, #tpu.memory_space<vmem>>, vector<1x32xf32>
    %c0_14 = arith.constant 0 : index
    %c0_15 = arith.constant 0 : index
    %8 = vector.load %arg9[%c0_14, %c0_15] : memref<32x32xbf16, #tpu.memory_space<vmem>>, vector<32x32xbf16>
    %c0_16 = arith.constant 0 : index
    %c0_17 = arith.constant 0 : index
    %9 = vector.load %arg10[%c0_16, %c0_17] : memref<1x32xf32, #tpu.memory_space<vmem>>, vector<1x32xf32>
    %10 = arith.truncf %1 : vector<8x32xf32> to vector<8x32xbf16>
    %cst = arith.constant dense<0.000000e+00> : vector<8x32xf32>
    %11 = tpu.matmul %10, %2, %cst {dimension_numbers = #tpu.dot_dimension_numbers<[1], [0], [0], [1], [0, 0, 1, 1], [], []>} : vector<8x32xbf16>, vector<32x32xbf16>, vector<8x32xf32> -> vector<8x32xf32>
    %12 = vector.broadcast %3 : vector<1x32xf32> to vector<8x32xf32>
    %13 = arith.addf %11, %12 : vector<8x32xf32>
    %14 = arith.truncf %1 : vector<8x32xf32> to vector<8x32xbf16>
    %cst_18 = arith.constant dense<0.000000e+00> : vector<8x32xf32>
    %15 = tpu.matmul %14, %4, %cst_18 {dimension_numbers = #tpu.dot_dimension_numbers<[1], [0], [0], [1], [0, 0, 1, 1], [], []>} : vector<8x32xbf16>, vector<32x32xbf16>, vector<8x32xf32> -> vector<8x32xf32>
    %16 = vector.broadcast %5 : vector<1x32xf32> to vector<8x32xf32>
    %17 = arith.addf %15, %16 : vector<8x32xf32>
    %18 = arith.truncf %1 : vector<8x32xf32> to vector<8x32xbf16>
    %cst_19 = arith.constant dense<0.000000e+00> : vector<8x32xf32>
    %19 = tpu.matmul %18, %6, %cst_19 {dimension_numbers = #tpu.dot_dimension_numbers<[1], [0], [0], [1], [0, 0, 1, 1], [], []>} : vector<8x32xbf16>, vector<32x32xbf16>, vector<8x32xf32> -> vector<8x32xf32>
    %20 = vector.broadcast %7 : vector<1x32xf32> to vector<8x32xf32>
    %21 = arith.addf %19, %20 : vector<8x32xf32>
    %22 = vector.extract_strided_slice %13 {offsets = [0, 0], sizes = [8, 8], strides = [1, 1]} : vector<8x32xf32> to vector<8x8xf32>
    %23 = arith.truncf %22 : vector<8x8xf32> to vector<8x8xbf16>
    %24 = vector.extract_strided_slice %17 {offsets = [0, 0], sizes = [8, 8], strides = [1, 1]} : vector<8x32xf32> to vector<8x8xf32>
    %25 = arith.truncf %24 : vector<8x8xf32> to vector<8x8xbf16>
    %cst_20 = arith.constant dense<0.000000e+00> : vector<8x8xf32>
    %26 = tpu.matmul %23, %25, %cst_20 {dimension_numbers = #tpu.dot_dimension_numbers<[1], [1], [0], [0], [0, 0, 1, 0], [], []>} : vector<8x8xbf16>, vector<8x8xbf16>, vector<8x8xf32> -> vector<8x8xf32>
    %cst_21 = arith.constant dense<0xFF800000> : vector<8xf32>
    %27 = vector.multi_reduction <maximumf>, %26, %cst_21 [1] : vector<8x8xf32> to vector<8xf32>
    %28 = vector.shape_cast %27 : vector<8xf32> to vector<8x1xf32>
    %29 = vector.broadcast %28 : vector<8x1xf32> to vector<8x8xf32>
    %30 = arith.subf %26, %29 : vector<8x8xf32>
    %31 = math.exp %30 : vector<8x8xf32>
    %cst_22 = arith.constant dense<0.000000e+00> : vector<8xf32>
    %32 = vector.multi_reduction <add>, %31, %cst_22 [1] : vector<8x8xf32> to vector<8xf32>
    %33 = vector.shape_cast %32 : vector<8xf32> to vector<8x1xf32>
    %34 = tpu.reciprocal %33 {approx = true} : vector<8x1xf32> -> vector<8x1xf32>
    %35 = vector.broadcast %34 : vector<8x1xf32> to vector<8x8xf32>
    %36 = arith.mulf %31, %35 : vector<8x8xf32>
    %37 = arith.truncf %36 : vector<8x8xf32> to vector<8x8xbf16>
    %38 = vector.extract_strided_slice %21 {offsets = [0, 0], sizes = [8, 8], strides = [1, 1]} : vector<8x32xf32> to vector<8x8xf32>
    %39 = arith.truncf %38 : vector<8x8xf32> to vector<8x8xbf16>
    %cst_23 = arith.constant dense<0.000000e+00> : vector<8x8xf32>
    %40 = tpu.matmul %37, %39, %cst_23 {dimension_numbers = #tpu.dot_dimension_numbers<[1], [0], [0], [1], [0, 0, 1, 1], [], []>} : vector<8x8xbf16>, vector<8x8xbf16>, vector<8x8xf32> -> vector<8x8xf32>
    %41 = vector.extract_strided_slice %13 {offsets = [0, 8], sizes = [8, 8], strides = [1, 1]} : vector<8x32xf32> to vector<8x8xf32>
    %42 = arith.truncf %41 : vector<8x8xf32> to vector<8x8xbf16>
    %43 = vector.extract_strided_slice %17 {offsets = [0, 8], sizes = [8, 8], strides = [1, 1]} : vector<8x32xf32> to vector<8x8xf32>
    %44 = arith.truncf %43 : vector<8x8xf32> to vector<8x8xbf16>
    %cst_24 = arith.constant dense<0.000000e+00> : vector<8x8xf32>
    %45 = tpu.matmul %42, %44, %cst_24 {dimension_numbers = #tpu.dot_dimension_numbers<[1], [1], [0], [0], [0, 0, 1, 0], [], []>} : vector<8x8xbf16>, vector<8x8xbf16>, vector<8x8xf32> -> vector<8x8xf32>
    %cst_25 = arith.constant dense<0xFF800000> : vector<8xf32>
    %46 = vector.multi_reduction <maximumf>, %45, %cst_25 [1] : vector<8x8xf32> to vector<8xf32>
    %47 = vector.shape_cast %46 : vector<8xf32> to vector<8x1xf32>
    %48 = vector.broadcast %47 : vector<8x1xf32> to vector<8x8xf32>
    %49 = arith.subf %45, %48 : vector<8x8xf32>
    %50 = math.exp %49 : vector<8x8xf32>
    %cst_26 = arith.constant dense<0.000000e+00> : vector<8xf32>
    %51 = vector.multi_reduction <add>, %50, %cst_26 [1] : vector<8x8xf32> to vector<8xf32>
    %52 = vector.shape_cast %51 : vector<8xf32> to vector<8x1xf32>
    %53 = tpu.reciprocal %52 {approx = true} : vector<8x1xf32> -> vector<8x1xf32>
    %54 = vector.broadcast %53 : vector<8x1xf32> to vector<8x8xf32>
    %55 = arith.mulf %50, %54 : vector<8x8xf32>
    %56 = arith.truncf %55 : vector<8x8xf32> to vector<8x8xbf16>
    %57 = vector.extract_strided_slice %21 {offsets = [0, 8], sizes = [8, 8], strides = [1, 1]} : vector<8x32xf32> to vector<8x8xf32>
    %58 = arith.truncf %57 : vector<8x8xf32> to vector<8x8xbf16>
    %cst_27 = arith.constant dense<0.000000e+00> : vector<8x8xf32>
    %59 = tpu.matmul %56, %58, %cst_27 {dimension_numbers = #tpu.dot_dimension_numbers<[1], [0], [0], [1], [0, 0, 1, 1], [], []>} : vector<8x8xbf16>, vector<8x8xbf16>, vector<8x8xf32> -> vector<8x8xf32>
    %60 = vector.extract_strided_slice %13 {offsets = [0, 16], sizes = [8, 8], strides = [1, 1]} : vector<8x32xf32> to vector<8x8xf32>
    %61 = arith.truncf %60 : vector<8x8xf32> to vector<8x8xbf16>
    %62 = vector.extract_strided_slice %17 {offsets = [0, 16], sizes = [8, 8], strides = [1, 1]} : vector<8x32xf32> to vector<8x8xf32>
    %63 = arith.truncf %62 : vector<8x8xf32> to vector<8x8xbf16>
    %cst_28 = arith.constant dense<0.000000e+00> : vector<8x8xf32>
    %64 = tpu.matmul %61, %63, %cst_28 {dimension_numbers = #tpu.dot_dimension_numbers<[1], [1], [0], [0], [0, 0, 1, 0], [], []>} : vector<8x8xbf16>, vector<8x8xbf16>, vector<8x8xf32> -> vector<8x8xf32>
    %cst_29 = arith.constant dense<0xFF800000> : vector<8xf32>
    %65 = vector.multi_reduction <maximumf>, %64, %cst_29 [1] : vector<8x8xf32> to vector<8xf32>
    %66 = vector.shape_cast %65 : vector<8xf32> to vector<8x1xf32>
    %67 = vector.broadcast %66 : vector<8x1xf32> to vector<8x8xf32>
    %68 = arith.subf %64, %67 : vector<8x8xf32>
    %69 = math.exp %68 : vector<8x8xf32>
    %cst_30 = arith.constant dense<0.000000e+00> : vector<8xf32>
    %70 = vector.multi_reduction <add>, %69, %cst_30 [1] : vector<8x8xf32> to vector<8xf32>
    %71 = vector.shape_cast %70 : vector<8xf32> to vector<8x1xf32>
    %72 = tpu.reciprocal %71 {approx = true} : vector<8x1xf32> -> vector<8x1xf32>
    %73 = vector.broadcast %72 : vector<8x1xf32> to vector<8x8xf32>
    %74 = arith.mulf %69, %73 : vector<8x8xf32>
    %75 = arith.truncf %74 : vector<8x8xf32> to vector<8x8xbf16>
    %76 = vector.extract_strided_slice %21 {offsets = [0, 16], sizes = [8, 8], strides = [1, 1]} : vector<8x32xf32> to vector<8x8xf32>
    %77 = arith.truncf %76 : vector<8x8xf32> to vector<8x8xbf16>
    %cst_31 = arith.constant dense<0.000000e+00> : vector<8x8xf32>
    %78 = tpu.matmul %75, %77, %cst_31 {dimension_numbers = #tpu.dot_dimension_numbers<[1], [0], [0], [1], [0, 0, 1, 1], [], []>} : vector<8x8xbf16>, vector<8x8xbf16>, vector<8x8xf32> -> vector<8x8xf32>
    %79 = vector.extract_strided_slice %13 {offsets = [0, 24], sizes = [8, 8], strides = [1, 1]} : vector<8x32xf32> to vector<8x8xf32>
    %80 = arith.truncf %79 : vector<8x8xf32> to vector<8x8xbf16>
    %81 = vector.extract_strided_slice %17 {offsets = [0, 24], sizes = [8, 8], strides = [1, 1]} : vector<8x32xf32> to vector<8x8xf32>
    %82 = arith.truncf %81 : vector<8x8xf32> to vector<8x8xbf16>
    %cst_32 = arith.constant dense<0.000000e+00> : vector<8x8xf32>
    %83 = tpu.matmul %80, %82, %cst_32 {dimension_numbers = #tpu.dot_dimension_numbers<[1], [1], [0], [0], [0, 0, 1, 0], [], []>} : vector<8x8xbf16>, vector<8x8xbf16>, vector<8x8xf32> -> vector<8x8xf32>
    %cst_33 = arith.constant dense<0xFF800000> : vector<8xf32>
    %84 = vector.multi_reduction <maximumf>, %83, %cst_33 [1] : vector<8x8xf32> to vector<8xf32>
    %85 = vector.shape_cast %84 : vector<8xf32> to vector<8x1xf32>
    %86 = vector.broadcast %85 : vector<8x1xf32> to vector<8x8xf32>
    %87 = arith.subf %83, %86 : vector<8x8xf32>
    %88 = math.exp %87 : vector<8x8xf32>
    %cst_34 = arith.constant dense<0.000000e+00> : vector<8xf32>
    %89 = vector.multi_reduction <add>, %88, %cst_34 [1] : vector<8x8xf32> to vector<8xf32>
    %90 = vector.shape_cast %89 : vector<8xf32> to vector<8x1xf32>
    %91 = tpu.reciprocal %90 {approx = true} : vector<8x1xf32> -> vector<8x1xf32>
    %92 = vector.broadcast %91 : vector<8x1xf32> to vector<8x8xf32>
    %93 = arith.mulf %88, %92 : vector<8x8xf32>
    %94 = arith.truncf %93 : vector<8x8xf32> to vector<8x8xbf16>
    %95 = vector.extract_strided_slice %21 {offsets = [0, 24], sizes = [8, 8], strides = [1, 1]} : vector<8x32xf32> to vector<8x8xf32>
    %96 = arith.truncf %95 : vector<8x8xf32> to vector<8x8xbf16>
    %cst_35 = arith.constant dense<0.000000e+00> : vector<8x8xf32>
    %97 = tpu.matmul %94, %96, %cst_35 {dimension_numbers = #tpu.dot_dimension_numbers<[1], [0], [0], [1], [0, 0, 1, 1], [], []>} : vector<8x8xbf16>, vector<8x8xbf16>, vector<8x8xf32> -> vector<8x8xf32>
    %98 = tpu.concatenate %40, %59, %78, %97 in 1 : vector<8x8xf32>, vector<8x8xf32>, vector<8x8xf32>, vector<8x8xf32> -> vector<8x32xf32>
    %99 = arith.truncf %98 : vector<8x32xf32> to vector<8x32xbf16>
    %cst_36 = arith.constant dense<0.000000e+00> : vector<8x32xf32>
    %100 = tpu.matmul %99, %8, %cst_36 {dimension_numbers = #tpu.dot_dimension_numbers<[1], [0], [0], [1], [0, 0, 1, 1], [], []>} : vector<8x32xbf16>, vector<32x32xbf16>, vector<8x32xf32> -> vector<8x32xf32>
    %101 = vector.broadcast %9 : vector<1x32xf32> to vector<8x32xf32>
    %102 = arith.addf %100, %101 : vector<8x32xf32>
    %103 = arith.addf %1, %102 : vector<8x32xf32>
    %c0_37 = arith.constant 0 : index
    %c0_38 = arith.constant 0 : index
    %104 = vector.load %arg11[%c0_37, %c0_38] : memref<1x32xf32, #tpu.memory_space<vmem>>, vector<1x32xf32>
    %c0_39 = arith.constant 0 : index
    %c0_40 = arith.constant 0 : index
    %105 = vector.load %arg12[%c0_39, %c0_40] : memref<1x32xf32, #tpu.memory_space<vmem>>, vector<1x32xf32>
    %cst_41 = arith.constant dense<0.000000e+00> : vector<8xf32>
    %106 = vector.multi_reduction <add>, %103, %cst_41 [1] : vector<8x32xf32> to vector<8xf32>
    %107 = vector.shape_cast %106 : vector<8xf32> to vector<8x1xf32>
    %cst_42 = arith.constant 3.200000e+01 : f32
    %108 = vector.broadcast %cst_42 : f32 to vector<8x1xf32>
    %109 = arith.divf %107, %108 : vector<8x1xf32>
    %110 = vector.broadcast %109 : vector<8x1xf32> to vector<8x32xf32>
    %111 = arith.subf %103, %110 : vector<8x32xf32>
    %112 = arith.mulf %111, %111 : vector<8x32xf32>
    %cst_43 = arith.constant dense<0.000000e+00> : vector<8xf32>
    %113 = vector.multi_reduction <add>, %112, %cst_43 [1] : vector<8x32xf32> to vector<8xf32>
    %114 = vector.shape_cast %113 : vector<8xf32> to vector<8x1xf32>
    %cst_44 = arith.constant 3.200000e+01 : f32
    %115 = vector.broadcast %cst_44 : f32 to vector<8x1xf32>
    %116 = arith.divf %114, %115 : vector<8x1xf32>
    %117 = vector.broadcast %109 : vector<8x1xf32> to vector<8x32xf32>
    %118 = arith.subf %103, %117 : vector<8x32xf32>
    %cst_45 = arith.constant 9.99999974E-6 : f32
    %119 = vector.broadcast %cst_45 : f32 to vector<8x1xf32>
    %120 = arith.addf %116, %119 : vector<8x1xf32>
    %121 = math.rsqrt %120 : vector<8x1xf32>
    %122 = vector.broadcast %121 : vector<8x1xf32> to vector<8x32xf32>
    %123 = arith.mulf %118, %122 : vector<8x32xf32>
    %124 = vector.broadcast %104 : vector<1x32xf32> to vector<8x32xf32>
    %125 = arith.mulf %123, %124 : vector<8x32xf32>
    %126 = vector.broadcast %105 : vector<1x32xf32> to vector<8x32xf32>
    %127 = arith.addf %125, %126 : vector<8x32xf32>
    %c0_46 = arith.constant 0 : index
    %c0_47 = arith.constant 0 : index
    %c0_48 = arith.constant 0 : index
    %128 = vector.load %arg2[%c0_46, %c0_47, %c0_48] : memref<1x8x32xf32, #tpu.memory_space<vmem>>, vector<1x8x32xf32>
    %129 = vector.shape_cast %128 : vector<1x8x32xf32> to vector<8x32xf32>
    %c0_49 = arith.constant 0 : index
    %c0_50 = arith.constant 0 : index
    %130 = vector.load %arg13[%c0_49, %c0_50] : memref<32x32xbf16, #tpu.memory_space<vmem>>, vector<32x32xbf16>
    %c0_51 = arith.constant 0 : index
    %c0_52 = arith.constant 0 : index
    %131 = vector.load %arg14[%c0_51, %c0_52] : memref<1x32xf32, #tpu.memory_space<vmem>>, vector<1x32xf32>
    %c0_53 = arith.constant 0 : index
    %c0_54 = arith.constant 0 : index
    %132 = vector.load %arg15[%c0_53, %c0_54] : memref<32x32xbf16, #tpu.memory_space<vmem>>, vector<32x32xbf16>
    %c0_55 = arith.constant 0 : index
    %c0_56 = arith.constant 0 : index
    %133 = vector.load %arg16[%c0_55, %c0_56] : memref<1x32xf32, #tpu.memory_space<vmem>>, vector<1x32xf32>
    %c0_57 = arith.constant 0 : index
    %c0_58 = arith.constant 0 : index
    %134 = vector.load %arg17[%c0_57, %c0_58] : memref<32x32xbf16, #tpu.memory_space<vmem>>, vector<32x32xbf16>
    %c0_59 = arith.constant 0 : index
    %c0_60 = arith.constant 0 : index
    %135 = vector.load %arg18[%c0_59, %c0_60] : memref<1x32xf32, #tpu.memory_space<vmem>>, vector<1x32xf32>
    %c0_61 = arith.constant 0 : index
    %c0_62 = arith.constant 0 : index
    %136 = vector.load %arg19[%c0_61, %c0_62] : memref<32x32xbf16, #tpu.memory_space<vmem>>, vector<32x32xbf16>
    %c0_63 = arith.constant 0 : index
    %c0_64 = arith.constant 0 : index
    %137 = vector.load %arg20[%c0_63, %c0_64] : memref<1x32xf32, #tpu.memory_space<vmem>>, vector<1x32xf32>
    %138 = arith.truncf %127 : vector<8x32xf32> to vector<8x32xbf16>
    %cst_65 = arith.constant dense<0.000000e+00> : vector<8x32xf32>
    %139 = tpu.matmul %138, %130, %cst_65 {dimension_numbers = #tpu.dot_dimension_numbers<[1], [0], [0], [1], [0, 0, 1, 1], [], []>} : vector<8x32xbf16>, vector<32x32xbf16>, vector<8x32xf32> -> vector<8x32xf32>
    %140 = vector.broadcast %131 : vector<1x32xf32> to vector<8x32xf32>
    %141 = arith.addf %139, %140 : vector<8x32xf32>
    %142 = arith.truncf %129 : vector<8x32xf32> to vector<8x32xbf16>
    %cst_66 = arith.constant dense<0.000000e+00> : vector<8x32xf32>
    %143 = tpu.matmul %142, %132, %cst_66 {dimension_numbers = #tpu.dot_dimension_numbers<[1], [0], [0], [1], [0, 0, 1, 1], [], []>} : vector<8x32xbf16>, vector<32x32xbf16>, vector<8x32xf32> -> vector<8x32xf32>
    %144 = vector.broadcast %133 : vector<1x32xf32> to vector<8x32xf32>
    %145 = arith.addf %143, %144 : vector<8x32xf32>
    %146 = arith.truncf %129 : vector<8x32xf32> to vector<8x32xbf16>
    %cst_67 = arith.constant dense<0.000000e+00> : vector<8x32xf32>
    %147 = tpu.matmul %146, %134, %cst_67 {dimension_numbers = #tpu.dot_dimension_numbers<[1], [0], [0], [1], [0, 0, 1, 1], [], []>} : vector<8x32xbf16>, vector<32x32xbf16>, vector<8x32xf32> -> vector<8x32xf32>
    %148 = vector.broadcast %135 : vector<1x32xf32> to vector<8x32xf32>
    %149 = arith.addf %147, %148 : vector<8x32xf32>
    %150 = vector.extract_strided_slice %141 {offsets = [0, 0], sizes = [8, 8], strides = [1, 1]} : vector<8x32xf32> to vector<8x8xf32>
    %151 = arith.truncf %150 : vector<8x8xf32> to vector<8x8xbf16>
    %152 = vector.extract_strided_slice %145 {offsets = [0, 0], sizes = [8, 8], strides = [1, 1]} : vector<8x32xf32> to vector<8x8xf32>
    %153 = arith.truncf %152 : vector<8x8xf32> to vector<8x8xbf16>
    %cst_68 = arith.constant dense<0.000000e+00> : vector<8x8xf32>
    %154 = tpu.matmul %151, %153, %cst_68 {dimension_numbers = #tpu.dot_dimension_numbers<[1], [1], [0], [0], [0, 0, 1, 0], [], []>} : vector<8x8xbf16>, vector<8x8xbf16>, vector<8x8xf32> -> vector<8x8xf32>
    %cst_69 = arith.constant dense<0xFF800000> : vector<8xf32>
    %155 = vector.multi_reduction <maximumf>, %154, %cst_69 [1] : vector<8x8xf32> to vector<8xf32>
    %156 = vector.shape_cast %155 : vector<8xf32> to vector<8x1xf32>
    %157 = vector.broadcast %156 : vector<8x1xf32> to vector<8x8xf32>
    %158 = arith.subf %154, %157 : vector<8x8xf32>
    %159 = math.exp %158 : vector<8x8xf32>
    %cst_70 = arith.constant dense<0.000000e+00> : vector<8xf32>
    %160 = vector.multi_reduction <add>, %159, %cst_70 [1] : vector<8x8xf32> to vector<8xf32>
    %161 = vector.shape_cast %160 : vector<8xf32> to vector<8x1xf32>
    %162 = tpu.reciprocal %161 {approx = true} : vector<8x1xf32> -> vector<8x1xf32>
    %163 = vector.broadcast %162 : vector<8x1xf32> to vector<8x8xf32>
    %164 = arith.mulf %159, %163 : vector<8x8xf32>
    %165 = arith.truncf %164 : vector<8x8xf32> to vector<8x8xbf16>
    %166 = vector.extract_strided_slice %149 {offsets = [0, 0], sizes = [8, 8], strides = [1, 1]} : vector<8x32xf32> to vector<8x8xf32>
    %167 = arith.truncf %166 : vector<8x8xf32> to vector<8x8xbf16>
    %cst_71 = arith.constant dense<0.000000e+00> : vector<8x8xf32>
    %168 = tpu.matmul %165, %167, %cst_71 {dimension_numbers = #tpu.dot_dimension_numbers<[1], [0], [0], [1], [0, 0, 1, 1], [], []>} : vector<8x8xbf16>, vector<8x8xbf16>, vector<8x8xf32> -> vector<8x8xf32>
    %169 = vector.extract_strided_slice %141 {offsets = [0, 8], sizes = [8, 8], strides = [1, 1]} : vector<8x32xf32> to vector<8x8xf32>
    %170 = arith.truncf %169 : vector<8x8xf32> to vector<8x8xbf16>
    %171 = vector.extract_strided_slice %145 {offsets = [0, 8], sizes = [8, 8], strides = [1, 1]} : vector<8x32xf32> to vector<8x8xf32>
    %172 = arith.truncf %171 : vector<8x8xf32> to vector<8x8xbf16>
    %cst_72 = arith.constant dense<0.000000e+00> : vector<8x8xf32>
    %173 = tpu.matmul %170, %172, %cst_72 {dimension_numbers = #tpu.dot_dimension_numbers<[1], [1], [0], [0], [0, 0, 1, 0], [], []>} : vector<8x8xbf16>, vector<8x8xbf16>, vector<8x8xf32> -> vector<8x8xf32>
    %cst_73 = arith.constant dense<0xFF800000> : vector<8xf32>
    %174 = vector.multi_reduction <maximumf>, %173, %cst_73 [1] : vector<8x8xf32> to vector<8xf32>
    %175 = vector.shape_cast %174 : vector<8xf32> to vector<8x1xf32>
    %176 = vector.broadcast %175 : vector<8x1xf32> to vector<8x8xf32>
    %177 = arith.subf %173, %176 : vector<8x8xf32>
    %178 = math.exp %177 : vector<8x8xf32>
    %cst_74 = arith.constant dense<0.000000e+00> : vector<8xf32>
    %179 = vector.multi_reduction <add>, %178, %cst_74 [1] : vector<8x8xf32> to vector<8xf32>
    %180 = vector.shape_cast %179 : vector<8xf32> to vector<8x1xf32>
    %181 = tpu.reciprocal %180 {approx = true} : vector<8x1xf32> -> vector<8x1xf32>
    %182 = vector.broadcast %181 : vector<8x1xf32> to vector<8x8xf32>
    %183 = arith.mulf %178, %182 : vector<8x8xf32>
    %184 = arith.truncf %183 : vector<8x8xf32> to vector<8x8xbf16>
    %185 = vector.extract_strided_slice %149 {offsets = [0, 8], sizes = [8, 8], strides = [1, 1]} : vector<8x32xf32> to vector<8x8xf32>
    %186 = arith.truncf %185 : vector<8x8xf32> to vector<8x8xbf16>
    %cst_75 = arith.constant dense<0.000000e+00> : vector<8x8xf32>
    %187 = tpu.matmul %184, %186, %cst_75 {dimension_numbers = #tpu.dot_dimension_numbers<[1], [0], [0], [1], [0, 0, 1, 1], [], []>} : vector<8x8xbf16>, vector<8x8xbf16>, vector<8x8xf32> -> vector<8x8xf32>
    %188 = vector.extract_strided_slice %141 {offsets = [0, 16], sizes = [8, 8], strides = [1, 1]} : vector<8x32xf32> to vector<8x8xf32>
    %189 = arith.truncf %188 : vector<8x8xf32> to vector<8x8xbf16>
    %190 = vector.extract_strided_slice %145 {offsets = [0, 16], sizes = [8, 8], strides = [1, 1]} : vector<8x32xf32> to vector<8x8xf32>
    %191 = arith.truncf %190 : vector<8x8xf32> to vector<8x8xbf16>
    %cst_76 = arith.constant dense<0.000000e+00> : vector<8x8xf32>
    %192 = tpu.matmul %189, %191, %cst_76 {dimension_numbers = #tpu.dot_dimension_numbers<[1], [1], [0], [0], [0, 0, 1, 0], [], []>} : vector<8x8xbf16>, vector<8x8xbf16>, vector<8x8xf32> -> vector<8x8xf32>
    %cst_77 = arith.constant dense<0xFF800000> : vector<8xf32>
    %193 = vector.multi_reduction <maximumf>, %192, %cst_77 [1] : vector<8x8xf32> to vector<8xf32>
    %194 = vector.shape_cast %193 : vector<8xf32> to vector<8x1xf32>
    %195 = vector.broadcast %194 : vector<8x1xf32> to vector<8x8xf32>
    %196 = arith.subf %192, %195 : vector<8x8xf32>
    %197 = math.exp %196 : vector<8x8xf32>
    %cst_78 = arith.constant dense<0.000000e+00> : vector<8xf32>
    %198 = vector.multi_reduction <add>, %197, %cst_78 [1] : vector<8x8xf32> to vector<8xf32>
    %199 = vector.shape_cast %198 : vector<8xf32> to vector<8x1xf32>
    %200 = tpu.reciprocal %199 {approx = true} : vector<8x1xf32> -> vector<8x1xf32>
    %201 = vector.broadcast %200 : vector<8x1xf32> to vector<8x8xf32>
    %202 = arith.mulf %197, %201 : vector<8x8xf32>
    %203 = arith.truncf %202 : vector<8x8xf32> to vector<8x8xbf16>
    %204 = vector.extract_strided_slice %149 {offsets = [0, 16], sizes = [8, 8], strides = [1, 1]} : vector<8x32xf32> to vector<8x8xf32>
    %205 = arith.truncf %204 : vector<8x8xf32> to vector<8x8xbf16>
    %cst_79 = arith.constant dense<0.000000e+00> : vector<8x8xf32>
    %206 = tpu.matmul %203, %205, %cst_79 {dimension_numbers = #tpu.dot_dimension_numbers<[1], [0], [0], [1], [0, 0, 1, 1], [], []>} : vector<8x8xbf16>, vector<8x8xbf16>, vector<8x8xf32> -> vector<8x8xf32>
    %207 = vector.extract_strided_slice %141 {offsets = [0, 24], sizes = [8, 8], strides = [1, 1]} : vector<8x32xf32> to vector<8x8xf32>
    %208 = arith.truncf %207 : vector<8x8xf32> to vector<8x8xbf16>
    %209 = vector.extract_strided_slice %145 {offsets = [0, 24], sizes = [8, 8], strides = [1, 1]} : vector<8x32xf32> to vector<8x8xf32>
    %210 = arith.truncf %209 : vector<8x8xf32> to vector<8x8xbf16>
    %cst_80 = arith.constant dense<0.000000e+00> : vector<8x8xf32>
    %211 = tpu.matmul %208, %210, %cst_80 {dimension_numbers = #tpu.dot_dimension_numbers<[1], [1], [0], [0], [0, 0, 1, 0], [], []>} : vector<8x8xbf16>, vector<8x8xbf16>, vector<8x8xf32> -> vector<8x8xf32>
    %cst_81 = arith.constant dense<0xFF800000> : vector<8xf32>
    %212 = vector.multi_reduction <maximumf>, %211, %cst_81 [1] : vector<8x8xf32> to vector<8xf32>
    %213 = vector.shape_cast %212 : vector<8xf32> to vector<8x1xf32>
    %214 = vector.broadcast %213 : vector<8x1xf32> to vector<8x8xf32>
    %215 = arith.subf %211, %214 : vector<8x8xf32>
    %216 = math.exp %215 : vector<8x8xf32>
    %cst_82 = arith.constant dense<0.000000e+00> : vector<8xf32>
    %217 = vector.multi_reduction <add>, %216, %cst_82 [1] : vector<8x8xf32> to vector<8xf32>
    %218 = vector.shape_cast %217 : vector<8xf32> to vector<8x1xf32>
    %219 = tpu.reciprocal %218 {approx = true} : vector<8x1xf32> -> vector<8x1xf32>
    %220 = vector.broadcast %219 : vector<8x1xf32> to vector<8x8xf32>
    %221 = arith.mulf %216, %220 : vector<8x8xf32>
    %222 = arith.truncf %221 : vector<8x8xf32> to vector<8x8xbf16>
    %223 = vector.extract_strided_slice %149 {offsets = [0, 24], sizes = [8, 8], strides = [1, 1]} : vector<8x32xf32> to vector<8x8xf32>
    %224 = arith.truncf %223 : vector<8x8xf32> to vector<8x8xbf16>
    %cst_83 = arith.constant dense<0.000000e+00> : vector<8x8xf32>
    %225 = tpu.matmul %222, %224, %cst_83 {dimension_numbers = #tpu.dot_dimension_numbers<[1], [0], [0], [1], [0, 0, 1, 1], [], []>} : vector<8x8xbf16>, vector<8x8xbf16>, vector<8x8xf32> -> vector<8x8xf32>
    %226 = tpu.concatenate %168, %187, %206, %225 in 1 : vector<8x8xf32>, vector<8x8xf32>, vector<8x8xf32>, vector<8x8xf32> -> vector<8x32xf32>
    %227 = arith.truncf %226 : vector<8x32xf32> to vector<8x32xbf16>
    %cst_84 = arith.constant dense<0.000000e+00> : vector<8x32xf32>
    %228 = tpu.matmul %227, %136, %cst_84 {dimension_numbers = #tpu.dot_dimension_numbers<[1], [0], [0], [1], [0, 0, 1, 1], [], []>} : vector<8x32xbf16>, vector<32x32xbf16>, vector<8x32xf32> -> vector<8x32xf32>
    %229 = vector.broadcast %137 : vector<1x32xf32> to vector<8x32xf32>
    %230 = arith.addf %228, %229 : vector<8x32xf32>
    %231 = arith.addf %127, %230 : vector<8x32xf32>
    %c0_85 = arith.constant 0 : index
    %c0_86 = arith.constant 0 : index
    %232 = vector.load %arg21[%c0_85, %c0_86] : memref<1x32xf32, #tpu.memory_space<vmem>>, vector<1x32xf32>
    %c0_87 = arith.constant 0 : index
    %c0_88 = arith.constant 0 : index
    %233 = vector.load %arg22[%c0_87, %c0_88] : memref<1x32xf32, #tpu.memory_space<vmem>>, vector<1x32xf32>
    %cst_89 = arith.constant dense<0.000000e+00> : vector<8xf32>
    %234 = vector.multi_reduction <add>, %231, %cst_89 [1] : vector<8x32xf32> to vector<8xf32>
    %235 = vector.shape_cast %234 : vector<8xf32> to vector<8x1xf32>
    %cst_90 = arith.constant 3.200000e+01 : f32
    %236 = vector.broadcast %cst_90 : f32 to vector<8x1xf32>
    %237 = arith.divf %235, %236 : vector<8x1xf32>
    %238 = vector.broadcast %237 : vector<8x1xf32> to vector<8x32xf32>
    %239 = arith.subf %231, %238 : vector<8x32xf32>
    %240 = arith.mulf %239, %239 : vector<8x32xf32>
    %cst_91 = arith.constant dense<0.000000e+00> : vector<8xf32>
    %241 = vector.multi_reduction <add>, %240, %cst_91 [1] : vector<8x32xf32> to vector<8xf32>
    %242 = vector.shape_cast %241 : vector<8xf32> to vector<8x1xf32>
    %cst_92 = arith.constant 3.200000e+01 : f32
    %243 = vector.broadcast %cst_92 : f32 to vector<8x1xf32>
    %244 = arith.divf %242, %243 : vector<8x1xf32>
    %245 = vector.broadcast %237 : vector<8x1xf32> to vector<8x32xf32>
    %246 = arith.subf %231, %245 : vector<8x32xf32>
    %cst_93 = arith.constant 9.99999974E-6 : f32
    %247 = vector.broadcast %cst_93 : f32 to vector<8x1xf32>
    %248 = arith.addf %244, %247 : vector<8x1xf32>
    %249 = math.rsqrt %248 : vector<8x1xf32>
    %250 = vector.broadcast %249 : vector<8x1xf32> to vector<8x32xf32>
    %251 = arith.mulf %246, %250 : vector<8x32xf32>
    %252 = vector.broadcast %232 : vector<1x32xf32> to vector<8x32xf32>
    %253 = arith.mulf %251, %252 : vector<8x32xf32>
    %254 = vector.broadcast %233 : vector<1x32xf32> to vector<8x32xf32>
    %255 = arith.addf %253, %254 : vector<8x32xf32>
    %c0_94 = arith.constant 0 : index
    %c0_95 = arith.constant 0 : index
    %256 = vector.load %arg23[%c0_94, %c0_95] : memref<32x64xbf16, #tpu.memory_space<vmem>>, vector<32x64xbf16>
    %c0_96 = arith.constant 0 : index
    %c0_97 = arith.constant 0 : index
    %257 = vector.load %arg24[%c0_96, %c0_97] : memref<1x64xf32, #tpu.memory_space<vmem>>, vector<1x64xf32>
    %c0_98 = arith.constant 0 : index
    %c0_99 = arith.constant 0 : index
    %258 = vector.load %arg25[%c0_98, %c0_99] : memref<64x32xbf16, #tpu.memory_space<vmem>>, vector<64x32xbf16>
    %c0_100 = arith.constant 0 : index
    %c0_101 = arith.constant 0 : index
    %259 = vector.load %arg26[%c0_100, %c0_101] : memref<1x32xf32, #tpu.memory_space<vmem>>, vector<1x32xf32>
    %260 = arith.truncf %255 : vector<8x32xf32> to vector<8x32xbf16>
    %cst_102 = arith.constant dense<0.000000e+00> : vector<8x64xf32>
    %261 = tpu.matmul %260, %256, %cst_102 {dimension_numbers = #tpu.dot_dimension_numbers<[1], [0], [0], [1], [0, 0, 1, 1], [], []>} : vector<8x32xbf16>, vector<32x64xbf16>, vector<8x64xf32> -> vector<8x64xf32>
    %262 = vector.broadcast %257 : vector<1x64xf32> to vector<8x64xf32>
    %263 = arith.addf %261, %262 : vector<8x64xf32>
    %cst_103 = arith.constant 0.000000e+00 : f32
    %264 = vector.broadcast %cst_103 : f32 to vector<8x64xf32>
    %265 = arith.maximumf %263, %264 : vector<8x64xf32>
    %266 = arith.truncf %265 : vector<8x64xf32> to vector<8x64xbf16>
    %cst_104 = arith.constant dense<0.000000e+00> : vector<8x32xf32>
    %267 = tpu.matmul %266, %258, %cst_104 {dimension_numbers = #tpu.dot_dimension_numbers<[1], [0], [0], [1], [0, 0, 1, 1], [], []>} : vector<8x64xbf16>, vector<64x32xbf16>, vector<8x32xf32> -> vector<8x32xf32>
    %268 = vector.broadcast %259 : vector<1x32xf32> to vector<8x32xf32>
    %269 = arith.addf %267, %268 : vector<8x32xf32>
    %270 = arith.addf %255, %269 : vector<8x32xf32>
    %c0_105 = arith.constant 0 : index
    %c0_106 = arith.constant 0 : index
    %271 = vector.load %arg27[%c0_105, %c0_106] : memref<1x32xf32, #tpu.memory_space<vmem>>, vector<1x32xf32>
    %c0_107 = arith.constant 0 : index
    %c0_108 = arith.constant 0 : index
    %272 = vector.load %arg28[%c0_107, %c0_108] : memref<1x32xf32, #tpu.memory_space<vmem>>, vector<1x32xf32>
    %cst_109 = arith.constant dense<0.000000e+00> : vector<8xf32>
    %273 = vector.multi_reduction <add>, %270, %cst_109 [1] : vector<8x32xf32> to vector<8xf32>
    %274 = vector.shape_cast %273 : vector<8xf32> to vector<8x1xf32>
    %cst_110 = arith.constant 3.200000e+01 : f32
    %275 = vector.broadcast %cst_110 : f32 to vector<8x1xf32>
    %276 = arith.divf %274, %275 : vector<8x1xf32>
    %277 = vector.broadcast %276 : vector<8x1xf32> to vector<8x32xf32>
    %278 = arith.subf %270, %277 : vector<8x32xf32>
    %279 = arith.mulf %278, %278 : vector<8x32xf32>
    %cst_111 = arith.constant dense<0.000000e+00> : vector<8xf32>
    %280 = vector.multi_reduction <add>, %279, %cst_111 [1] : vector<8x32xf32> to vector<8xf32>
    %281 = vector.shape_cast %280 : vector<8xf32> to vector<8x1xf32>
    %cst_112 = arith.constant 3.200000e+01 : f32
    %282 = vector.broadcast %cst_112 : f32 to vector<8x1xf32>
    %283 = arith.divf %281, %282 : vector<8x1xf32>
    %284 = vector.broadcast %276 : vector<8x1xf32> to vector<8x32xf32>
    %285 = arith.subf %270, %284 : vector<8x32xf32>
    %cst_113 = arith.constant 9.99999974E-6 : f32
    %286 = vector.broadcast %cst_113 : f32 to vector<8x1xf32>
    %287 = arith.addf %283, %286 : vector<8x1xf32>
    %288 = math.rsqrt %287 : vector<8x1xf32>
    %289 = vector.broadcast %288 : vector<8x1xf32> to vector<8x32xf32>
    %290 = arith.mulf %285, %289 : vector<8x32xf32>
    %291 = vector.broadcast %271 : vector<1x32xf32> to vector<8x32xf32>
    %292 = arith.mulf %290, %291 : vector<8x32xf32>
    %293 = vector.broadcast %272 : vector<1x32xf32> to vector<8x32xf32>
    %294 = arith.addf %292, %293 : vector<8x32xf32>
    %c0_114 = arith.constant 0 : index
    %c0_115 = arith.constant 0 : index
    %c0_116 = arith.constant 0 : index
    %295 = vector.load %arg29[%c0_114, %c0_115, %c0_116] : memref<1x8x32xf32, #tpu.memory_space<vmem>>, vector<1x8x32xf32>
    %296 = vector.shape_cast %295 : vector<1x8x32xf32> to vector<8x32xf32>
    %297 = vector.shape_cast %294 : vector<8x32xf32> to vector<1x8x32xf32>
    tpu.vector_store %arg29[%c0_114, %c0_115, %c0_116], %297 {strides = array<i32>} : memref<1x8x32xf32, #tpu.memory_space<vmem>>, vector<1x8x32xf32>,
    return
  }
  func.func @transform_0(%arg0: i32) -> (i32, i32, i32) {
    %c0_i32 = arith.constant 0 : i32
    %c0_i32_0 = arith.constant 0 : i32
    %c0_i32_1 = arith.constant 0 : i32
    return %arg0, %c0_i32, %c0_i32_0 : i32, i32, i32
  }
  func.func @transform_1(%arg0: i32) -> (i32, i32, i32) {
    %c0_i32 = arith.constant 0 : i32
    %c0_i32_0 = arith.constant 0 : i32
    %c0_i32_1 = arith.constant 0 : i32
    return %arg0, %c0_i32, %c0_i32_0 : i32, i32, i32
  }
  func.func @transform_2(%arg0: i32) -> (i32, i32) {
    %c0_i32 = arith.constant 0 : i32
    %c0_i32_0 = arith.constant 0 : i32
    %c0_i32_1 = arith.constant 0 : i32
    return %c0_i32, %c0_i32_0 : i32, i32
  }
  func.func @transform_3(%arg0: i32) -> (i32, i32) {
    %c0_i32 = arith.constant 0 : i32
    %c0_i32_0 = arith.constant 0 : i32
    %c0_i32_1 = arith.constant 0 : i32
    return %c0_i32, %c0_i32_0 : i32, i32
  }
  func.func @transform_4(%arg0: i32) -> (i32, i32) {
    %c0_i32 = arith.constant 0 : i32
    %c0_i32_0 = arith.constant 0 : i32
    %c0_i32_1 = arith.constant 0 : i32
    return %c0_i32, %c0_i32_0 : i32, i32
  }
  func.func @transform_5(%arg0: i32) -> (i32, i32) {
    %c0_i32 = arith.constant 0 : i32
    %c0_i32_0 = arith.constant 0 : i32
    %c0_i32_1 = arith.constant 0 : i32
    return %c0_i32, %c0_i32_0 : i32, i32
  }
  func.func @transform_6(%arg0: i32) -> (i32, i32) {
    %c0_i32 = arith.constant 0 : i32
    %c0_i32_0 = arith.constant 0 : i32
    %c0_i32_1 = arith.constant 0 : i32
    return %c0_i32, %c0_i32_0 : i32, i32
  }
  func.func @transform_7(%arg0: i32) -> (i32, i32) {
    %c0_i32 = arith.constant 0 : i32
    %c0_i32_0 = arith.constant 0 : i32
    %c0_i32_1 = arith.constant 0 : i32
    return %c0_i32, %c0_i32_0 : i32, i32
  }
  func.func @transform_8(%arg0: i32) -> (i32, i32) {
    %c0_i32 = arith.constant 0 : i32
    %c0_i32_0 = arith.constant 0 : i32
    %c0_i32_1 = arith.constant 0 : i32
    return %c0_i32, %c0_i32_0 : i32, i32
  }
  func.func @transform_9(%arg0: i32) -> (i32, i32) {
    %c0_i32 = arith.constant 0 : i32
    %c0_i32_0 = arith.constant 0 : i32
    %c0_i32_1 = arith.constant 0 : i32
    return %c0_i32, %c0_i32_0 : i32, i32
  }
  func.func @transform_10(%arg0: i32) -> (i32, i32) {
    %c0_i32 = arith.constant 0 : i32
    %c0_i32_0 = arith.constant 0 : i32
    %c0_i32_1 = arith.constant 0 : i32
    return %c0_i32, %c0_i32_0 : i32, i32
  }
  func.func @transform_11(%arg0: i32) -> (i32, i32) {
    %c0_i32 = arith.constant 0 : i32
    %c0_i32_0 = arith.constant 0 : i32
    %c0_i32_1 = arith.constant 0 : i32
    return %c0_i32, %c0_i32_0 : i32, i32
  }
  func.func @transform_12(%arg0: i32) -> (i32, i32) {
    %c0_i32 = arith.constant 0 : i32
    %c0_i32_0 = arith.constant 0 : i32
    %c0_i32_1 = arith.constant 0 : i32
    return %c0_i32, %c0_i32_0 : i32, i32
  }
  func.func @transform_13(%arg0: i32) -> (i32, i32) {
    %c0_i32 = arith.constant 0 : i32
    %c0_i32_0 = arith.constant 0 : i32
    %c0_i32_1 = arith.constant 0 : i32
    return %c0_i32, %c0_i32_0 : i32, i32
  }
  func.func @transform_14(%arg0: i32) -> (i32, i32) {
    %c0_i32 = arith.constant 0 : i32
    %c0_i32_0 = arith.constant 0 : i32
    %c0_i32_1 = arith.constant 0 : i32
    return %c0_i32, %c0_i32_0 : i32, i32
  }
  func.func @transform_15(%arg0: i32) -> (i32, i32) {
    %c0_i32 = arith.constant 0 : i32
    %c0_i32_0 = arith.constant 0 : i32
    %c0_i32_1 = arith.constant 0 : i32
    return %c0_i32, %c0_i32_0 : i32, i32
  }
  func.func @transform_16(%arg0: i32) -> (i32, i32) {
    %c0_i32 = arith.constant 0 : i32
    %c0_i32_0 = arith.constant 0 : i32
    %c0_i32_1 = arith.constant 0 : i32
    return %c0_i32, %c0_i32_0 : i32, i32
  }
  func.func @transform_17(%arg0: i32) -> (i32, i32) {
    %c0_i32 = arith.constant 0 : i32
    %c0_i32_0 = arith.constant 0 : i32
    %c0_i32_1 = arith.constant 0 : i32
    return %c0_i32, %c0_i32_0 : i32, i32
  }
  func.func @transform_18(%arg0: i32) -> (i32, i32) {
    %c0_i32 = arith.constant 0 : i32
    %c0_i32_0 = arith.constant 0 : i32
    %c0_i32_1 = arith.constant 0 : i32
    return %c0_i32, %c0_i32_0 : i32, i32
  }
  func.func @transform_19(%arg0: i32) -> (i32, i32) {
    %c0_i32 = arith.constant 0 : i32
    %c0_i32_0 = arith.constant 0 : i32
    %c0_i32_1 = arith.constant 0 : i32
    return %c0_i32, %c0_i32_0 : i32, i32
  }
  func.func @transform_20(%arg0: i32) -> (i32, i32) {
    %c0_i32 = arith.constant 0 : i32
    %c0_i32_0 = arith.constant 0 : i32
    %c0_i32_1 = arith.constant 0 : i32
    return %c0_i32, %c0_i32_0 : i32, i32
  }
  func.func @transform_21(%arg0: i32) -> (i32, i32) {
    %c0_i32 = arith.constant 0 : i32
    %c0_i32_0 = arith.constant 0 : i32
    %c0_i32_1 = arith.constant 0 : i32
    return %c0_i32, %c0_i32_0 : i32, i32
  }
  func.func @transform_22(%arg0: i32) -> (i32, i32) {
    %c0_i32 = arith.constant 0 : i32
    %c0_i32_0 = arith.constant 0 : i32
    %c0_i32_1 = arith.constant 0 : i32
    return %c0_i32, %c0_i32_0 : i32, i32
  }
  func.func @transform_23(%arg0: i32) -> (i32, i32) {
    %c0_i32 = arith.constant 0 : i32
    %c0_i32_0 = arith.constant 0 : i32
    %c0_i32_1 = arith.constant 0 : i32
    return %c0_i32, %c0_i32_0 : i32, i32
  }
  func.func @transform_24(%arg0: i32) -> (i32, i32) {
    %c0_i32 = arith.constant 0 : i32
    %c0_i32_0 = arith.constant 0 : i32
    %c0_i32_1 = arith.constant 0 : i32
    return %c0_i32, %c0_i32_0 : i32, i32
  }
  func.func @transform_25(%arg0: i32) -> (i32, i32) {
    %c0_i32 = arith.constant 0 : i32
    %c0_i32_0 = arith.constant 0 : i32
    %c0_i32_1 = arith.constant 0 : i32
    return %c0_i32, %c0_i32_0 : i32, i32
  }
  func.func @transform_26(%arg0: i32) -> (i32, i32) {
    %c0_i32 = arith.constant 0 : i32
    %c0_i32_0 = arith.constant 0 : i32
    %c0_i32_1 = arith.constant 0 : i32
    return %c0_i32, %c0_i32_0 : i32, i32
  }
  func.func @transform_27(%arg0: i32) -> (i32, i32) {
    %c0_i32 = arith.constant 0 : i32
    %c0_i32_0 = arith.constant 0 : i32
    %c0_i32_1 = arith.constant 0 : i32
    return %c0_i32, %c0_i32_0 : i32, i32
  }
  func.func @transform_28(%arg0: i32) -> (i32, i32, i32) {
    %c0_i32 = arith.constant 0 : i32
    %c0_i32_0 = arith.constant 0 : i32
    %c0_i32_1 = arith.constant 0 : i32
    return %arg0, %c0_i32, %c0_i32_0 : i32, i32, i32
  }
}

</mosaic_0001>

<llo_original>
// kernel: _lambda_.1
$region0: #{_lambda_.1}
  #allocation0 [shape = 'u32[]', space=smem, size = 0x4, offset = 0x4, fixed_abs, tag = 'smem constant byte address 0x4 - core index']
  #allocation1 [shape = 'u32[72,128]{1,0:T(1,128)}', space=vmem, size = 0x9000, scoped, tag = 'internal scratch']
  %s0 = inlined_call_operand.vmem [shape: f32[2,8,32], index: 0, kind: input, shape index: {}]
  %s1 = inlined_call_operand.vmem [shape: f32[2,8,32], index: 1, kind: input, shape index: {}]
  %s2 = inlined_call_operand.vmem [shape: bf16[32,32], index: 2, kind: input, shape index: {}]
  %s3 = inlined_call_operand.vmem [shape: f32[1,32], index: 3, kind: input, shape index: {}]
  %s4 = inlined_call_operand.vmem [shape: bf16[32,32], index: 4, kind: input, shape index: {}]
  %s5 = inlined_call_operand.vmem [shape: f32[1,32], index: 5, kind: input, shape index: {}]
  %s6 = inlined_call_operand.hbm [shape: bf16[32,32], index: 6, kind: input, shape index: {}]
  %s7 = inlined_call_operand.vmem [shape: f32[1,32], index: 7, kind: input, shape index: {}]
  %s8 = inlined_call_operand.hbm [shape: bf16[32,32], index: 8, kind: input, shape index: {}]
  %s9 = inlined_call_operand.vmem [shape: f32[1,32], index: 9, kind: input, shape index: {}]
  %s10 = inlined_call_operand.hbm [shape: f32[1,32], index: 10, kind: input, shape index: {}]
  %s11 = inlined_call_operand.hbm [shape: f32[1,32], index: 11, kind: input, shape index: {}]
  %s12 = inlined_call_operand.hbm [shape: bf16[32,32], index: 12, kind: input, shape index: {}]
  %s13 = inlined_call_operand.hbm [shape: f32[1,32], index: 13, kind: input, shape index: {}]
  %s14 = inlined_call_operand.hbm [shape: bf16[32,32], index: 14, kind: input, shape index: {}]
  %s15 = inlined_call_operand.hbm [shape: f32[1,32], index: 15, kind: input, shape index: {}]
  %s16 = inlined_call_operand.hbm [shape: bf16[32,32], index: 16, kind: input, shape index: {}]
  %s17 = inlined_call_operand.hbm [shape: f32[1,32], index: 17, kind: input, shape index: {}]
  %s18 = inlined_call_operand.hbm [shape: bf16[32,32], index: 18, kind: input, shape index: {}]
  %s19 = inlined_call_operand.hbm [shape: f32[1,32], index: 19, kind: input, shape index: {}]
  %s20 = inlined_call_operand.hbm [shape: f32[1,32], index: 20, kind: input, shape index: {}]
  %s21 = inlined_call_operand.hbm [shape: f32[1,32], index: 21, kind: input, shape index: {}]
  %s22 = inlined_call_operand.hbm [shape: bf16[32,64], index: 22, kind: input, shape index: {}]
  %s23 = inlined_call_operand.hbm [shape: f32[1,64], index: 23, kind: input, shape index: {}]
  %s24 = inlined_call_operand.vmem [shape: bf16[64,32], index: 24, kind: input, shape index: {}]
  %s25 = inlined_call_operand.hbm [shape: f32[1,32], index: 25, kind: input, shape index: {}]
  %s26 = inlined_call_operand.hbm [shape: f32[1,32], index: 26, kind: input, shape index: {}]
  %s27 = inlined_call_operand.hbm [shape: f32[1,32], index: 27, kind: input, shape index: {}]
  %s28 = inlined_call_operand.hbm [shape: f32[2,8,32], index: 28, kind: output, shape index: {}]
  %s29 = sld [smem:[#allocation0]]
  $region221: #{_lambda_.1} parent=0
    _
  %s31 = ssub.s32 1, %s29
  %s32 = scalar_select 0, %s31, %s29
  $region1: #{_lambda_.1} parent=0
    #allocation2 [shape = 'u8[8192]{0}', space=vmem, size = 0x2000, scoped, tag = 'input window, operand 6, single buffered']
    #allocation3 [shape = 's32[2]{0}', space=sflag, size = 0x8, scoped, tag = 'scoped memory for _lambda_.1']
    #allocation4 [shape = 's32[2]{0}', space=sflag, size = 0x8, scoped, tag = 'scoped memory for _lambda_.1']
    #allocation5 [shape = 'u8[8192]{0}', space=vmem, size = 0x2000, scoped, tag = 'input window, operand 8, single buffered']
    #allocation6 [shape = 's32[1]{0}', space=sflag, size = 0x4, scoped, tag = 'scoped memory for _lambda_.1']
    #allocation7 [shape = 'u8[512]{0}', space=vmem, size = 0x400, scoped, tag = 'input window, operand 10, single buffered']
    #allocation8 [shape = 'u8[512]{0}', space=vmem, size = 0x400, scoped, tag = 'input window, operand 11, single buffered']
    #allocation9 [shape = 's32[1]{0}', space=sflag, size = 0x4, scoped, tag = 'scoped memory for _lambda_.1']
    #allocation10 [shape = 'u8[8192]{0}', space=vmem, size = 0x2000, scoped, tag = 'input window, operand 12, single buffered']
    #allocation11 [shape = 'u8[512]{0}', space=vmem, size = 0x400, scoped, tag = 'input window, operand 13, single buffered']
    #allocation12 [shape = 's32[1]{0}', space=sflag, size = 0x4, scoped, tag = 'scoped memory for _lambda_.1']
    #allocation13 [shape = 'u8[8192]{0}', space=vmem, size = 0x2000, scoped, tag = 'input window, operand 14, single buffered']
    #allocation14 [shape = 'u8[512]{0}', space=vmem, size = 0x400, scoped, tag = 'input window, operand 15, single buffered']
    #allocation15 [shape = 's32[1]{0}', space=sflag, size = 0x4, scoped, tag = 'scoped memory for _lambda_.1']
    #allocation16 [shape = 'u8[8192]{0}', space=vmem, size = 0x2000, scoped, tag = 'input window, operand 16, single buffered']
    #allocation17 [shape = 'u8[512]{0}', space=vmem, size = 0x400, scoped, tag = 'input window, operand 17, single buffered']
    #allocation18 [shape = 's32[1]{0}', space=sflag, size = 0x4, scoped, tag = 'scoped memory for _lambda_.1']
    #allocation19 [shape = 'u8[8192]{0}', space=vmem, size = 0x2000, scoped, tag = 'input window, operand 18, single buffered']
    #allocation20 [shape = 'u8[512]{0}', space=vmem, size = 0x400, scoped, tag = 'input window, operand 19, single buffered']
    #allocation21 [shape = 's32[1]{0}', space=sflag, size = 0x4, scoped, tag = 'scoped memory for _lambda_.1']
    #allocation22 [shape = 'u8[512]{0}', space=vmem, size = 0x400, scoped, tag = 'input window, operand 20, single buffered']
    #allocation23 [shape = 'u8[512]{0}', space=vmem, size = 0x400, scoped, tag = 'input window, operand 21, single buffered']
    #allocation24 [shape = 's32[1]{0}', space=sflag, size = 0x4, scoped, tag = 'scoped memory for _lambda_.1']
    #allocation25 [shape = 'u8[8192]{0}', space=vmem, size = 0x2000, scoped, tag = 'input window, operand 22, single buffered']
    #allocation26 [shape = 'u8[512]{0}', space=vmem, size = 0x400, scoped, tag = 'input window, operand 23, single buffered']
    #allocation27 [shape = 's32[1]{0}', space=sflag, size = 0x4, scoped, tag = 'scoped memory for _lambda_.1']
    #allocation28 [shape = 'u8[512]{0}', space=vmem, size = 0x400, scoped, tag = 'input window, operand 25, single buffered']
    #allocation29 [shape = 'u8[512]{0}', space=vmem, size = 0x400, scoped, tag = 'input window, operand 26, single buffered']
    #allocation30 [shape = 's32[1]{0}', space=sflag, size = 0x4, scoped, tag = 'scoped memory for _lambda_.1']
    #allocation31 [shape = 'u8[512]{0}', space=vmem, size = 0x400, scoped, tag = 'input window, operand 27, single buffered']
    #allocation32 [shape = 'u8[8192]{0}', space=vmem, size = 0x2000, scoped, tag = 'output window, operand 0']
    %33 = vsyncpa [#allocation3], 0
    %34 = vsyncpa [#allocation6], 0
    %35 = vsyncpa [#allocation9], 0
    %36 = vsyncpa [#allocation12], 0
    %37 = vsyncpa [#allocation15], 0
    %38 = vsyncpa [#allocation18], 0
    %39 = vsyncpa [#allocation21], 0
    %40 = vsyncpa [#allocation24], 0
    %41 = vsyncpa [#allocation27], 0
    %42 = vsyncpa [#allocation30], 0
    %43 = vsyncpa [#allocation4], 0
    %s44 = scalar_lea.sflag [#allocation4], 1
    %45 = vsyncpa %s44, 0
    loop: start=0, step=1, limit=4
    $region2: #{_lambda_.1} parent=1 // loop_pre_header
      _
    $region3: #{_lambda_.1} parent=1 // loop_header
      %s47 = sphi 0, %s51
      %p48 = scmp.ge.s32.totalorder %s47, 4
      %s57 = sphi 0, %s59
      %s60 = sphi 0, %s57
      %s61 = sphi 0, %s60
      %s77 = sphi 0, %s61
      %s83 = sphi 0, %s85
      %s86 = sphi 0, %s83
      %s87 = sphi 0, %s86
      %s103 = sphi 0, %s87
      %s107 = sphi 0, %s107
      %s109 = sphi 0, %s107
      %s110 = sphi 0, %s109
      %s124 = sphi 0, %s110
      %s128 = sphi 0, %s128
      %s130 = sphi 0, %s128
      %s131 = sphi 0, %s130
      %s145 = sphi 0, %s131
      %s149 = sphi 0, %s149
      %s151 = sphi 0, %s149
      %s152 = sphi 0, %s151
      %s166 = sphi 0, %s152
      %s170 = sphi 0, %s170
      %s172 = sphi 0, %s170
      %s173 = sphi 0, %s172
      %s187 = sphi 0, %s173
      %s191 = sphi 0, %s191
      %s193 = sphi 0, %s191
      %s194 = sphi 0, %s193
      %s208 = sphi 0, %s194
      %s212 = sphi 0, %s212
      %s214 = sphi 0, %s212
      %s215 = sphi 0, %s214
      %s229 = sphi 0, %s215
      %s233 = sphi 0, %s233
      %s235 = sphi 0, %s233
      %s236 = sphi 0, %s235
      %s250 = sphi 0, %s236
      %s254 = sphi 0, %s254
      %s256 = sphi 0, %s254
      %s257 = sphi 0, %s256
      %s271 = sphi 0, %s257
      %s275 = sphi 0, %s275
      %s277 = sphi 0, %s275
      %s278 = sphi 0, %s277
      %s292 = sphi 0, %s278
      %s296 = sphi 0, %s296
      %s298 = sphi 0, %s296
      %s299 = sphi 0, %s298
      %s313 = sphi 0, %s299
      %s317 = sphi 0, %s317
      %s319 = sphi 0, %s317
      %s320 = sphi 0, %s319
      %s334 = sphi 0, %s320
      %s338 = sphi 0, %s338
      %s340 = sphi 0, %s338
      %s341 = sphi 0, %s340
      %s355 = sphi 0, %s341
      %s359 = sphi 0, %s359
      %s361 = sphi 0, %s359
      %s362 = sphi 0, %s361
      %s376 = sphi 0, %s362
      %s380 = sphi 0, %s380
      %s382 = sphi 0, %s380
      %s383 = sphi 0, %s382
      %s397 = sphi 0, %s383
      %s401 = sphi 0, %s401
      %s403 = sphi 0, %s401
      %s404 = sphi 0, %s403
      %s418 = sphi 0, %s404
      %s422 = sphi 0, %s422
      %s424 = sphi 0, %s422
      %s425 = sphi 0, %s424
      %s439 = sphi 0, %s425
      %s443 = sphi 0, %s443
      %s445 = sphi 0, %s443
      %s446 = sphi 0, %s445
      %s460 = sphi 0, %s446
      %s464 = sphi 0, %s464
      %s466 = sphi 0, %s464
      %s467 = sphi 0, %s466
      %s481 = sphi 0, %s467
      %s485 = sphi 0, %s485
      %s487 = sphi 0, %s485
      %s488 = sphi 0, %s487
      %s502 = sphi 0, %s488
      %s506 = sphi 0, %s506
      %s508 = sphi 0, %s506
      %s509 = sphi 0, %s508
      %s523 = sphi 0, %s509
      %s527 = sphi 0, %s527
      %s529 = sphi 0, %s527
      %s530 = sphi 0, %s529
      %s544 = sphi 0, %s530
      %s548 = sphi 0, %s548
      %s550 = sphi 0, %s548
      %s551 = sphi 0, %s550
      %s565 = sphi 0, %s551
      %s569 = sphi 0, %s569
      %s571 = sphi 0, %s569
      %s572 = sphi 0, %s571
      %s586 = sphi 0, %s572
      %s590 = sphi 0, %s590
      %s592 = sphi 0, %s590
      %s593 = sphi 0, %s592
      %s607 = sphi 0, %s593
      %s611 = sphi 0, %s611
      %s613 = sphi 0, %s611
      %s614 = sphi 0, %s613
      %s628 = sphi 0, %s614
      %s632 = sphi 0, %s632
      %s634 = sphi 0, %s632
      %s635 = sphi 0, %s634
      %s649 = sphi 0, %s635
      %s655 = sphi 0, %s657
      %s658 = sphi 0, %s655
      %s659 = sphi 0, %s658
      %s675 = sphi 0, %s659
    $region4: #{_lambda_.1} parent=1 // loop_header_branch
      %50 = sbr.rel (%p48) target = $region8
    $region5: #{_lambda_.1} parent=1 // loop_body
      %s52 = ssub.s32 %s47, 1
      %s53 = ssub.s32 %s47, 2
      %s54 = sadd.s32 %s47, 1
      %s55 = ssub.s32 %s47, %s54
      %p56 = scmp.eq.s32.totalorder %s55, 0
      %s58 = sadd.s32 %s57, 1
      %s59 = scalar_select %p56, %s57, %s58
      %p62 = pneg %p56
      %p63 = scmp.eq.s32.totalorder %s47, 1
      %p64 = por %p62, %p63
      %p65 = scmp.ne.s32.totalorder %s57, %s60
      %p66 = scmp.eq.s32.totalorder %s47, 0
      %p67 = por %p65, %p66
      %p68 = scmp.ne.s32.totalorder %s57, %s60
      %p69 = scmp.eq.s32.totalorder %s52, 1
      %p70 = por %p68, %p69
      %p71 = scmp.ne.s32.totalorder %s60, %s61
      %p72 = scmp.eq.s32.totalorder %s52, 0
      %p73 = por %p71, %p72
      %p74 = scmp.ne.s32.totalorder %s60, %s61
      %p75 = scmp.eq.s32.totalorder %s53, 1
      %p76 = por %p74, %p75
      %p78 = scmp.ne.s32.totalorder %s61, %s77
      %p79 = scmp.eq.s32.totalorder %s53, 0
      %p80 = por %p78, %p79
      %s81 = ssub.s32 %s47, %s54
      %p82 = scmp.eq.s32.totalorder %s81, 0
      %s84 = sadd.s32 %s83, 1
      %s85 = scalar_select %p82, %s83, %s84
      %p88 = pneg %p82
      %p89 = scmp.eq.s32.totalorder %s47, 1
      %p90 = por %p88, %p89
      %p91 = scmp.ne.s32.totalorder %s83, %s86
      %p92 = scmp.eq.s32.totalorder %s47, 0
      %p93 = por %p91, %p92
      %p94 = scmp.ne.s32.totalorder %s83, %s86
      %p95 = scmp.eq.s32.totalorder %s52, 1
      %p96 = por %p94, %p95
      %p97 = scmp.ne.s32.totalorder %s86, %s87
      %p98 = scmp.eq.s32.totalorder %s52, 0
      %p99 = por %p97, %p98
      %p100 = scmp.ne.s32.totalorder %s86, %s87
      %p101 = scmp.eq.s32.totalorder %s53, 1
      %p102 = por %p100, %p101
      %p104 = scmp.ne.s32.totalorder %s87, %s103
      %p105 = scmp.eq.s32.totalorder %s53, 0
      %p106 = por %p104, %p105
      %s108 = sadd.s32 %s107, 1
      %p111 = scmp.eq.s32.totalorder %s47, 1
      %p112 = scmp.ne.s32.totalorder %s107, %s109
      %p113 = scmp.eq.s32.totalorder %s47, 0
      %p114 = por %p112, %p113
      %p115 = scmp.ne.s32.totalorder %s107, %s109
      %p116 = scmp.eq.s32.totalorder %s52, 1
      %p117 = por %p115, %p116
      %p118 = scmp.ne.s32.totalorder %s109, %s110
      %p119 = scmp.eq.s32.totalorder %s52, 0
      %p120 = por %p118, %p119
      %p121 = scmp.ne.s32.totalorder %s109, %s110
      %p122 = scmp.eq.s32.totalorder %s53, 1
      %p123 = por %p121, %p122
      %p125 = scmp.ne.s32.totalorder %s110, %s124
      %p126 = scmp.eq.s32.totalorder %s53, 0
      %p127 = por %p125, %p126
      %s129 = sadd.s32 %s128, 1
      %p132 = scmp.eq.s32.totalorder %s47, 1
      %p133 = scmp.ne.s32.totalorder %s128, %s130
      %p134 = scmp.eq.s32.totalorder %s47, 0
      %p135 = por %p133, %p134
      %p136 = scmp.ne.s32.totalorder %s128, %s130
      %p137 = scmp.eq.s32.totalorder %s52, 1
      %p138 = por %p136, %p137
      %p139 = scmp.ne.s32.totalorder %s130, %s131
      %p140 = scmp.eq.s32.totalorder %s52, 0
      %p141 = por %p139, %p140
      %p142 = scmp.ne.s32.totalorder %s130, %s131
      %p143 = scmp.eq.s32.totalorder %s53, 1
      %p144 = por %p142, %p143
      %p146 = scmp.ne.s32.totalorder %s131, %s145
      %p147 = scmp.eq.s32.totalorder %s53, 0
      %p148 = por %p146, %p147
      %s150 = sadd.s32 %s149, 1
      %p153 = scmp.eq.s32.totalorder %s47, 1
      %p154 = scmp.ne.s32.totalorder %s149, %s151
      %p155 = scmp.eq.s32.totalorder %s47, 0
      %p156 = por %p154, %p155
      %p157 = scmp.ne.s32.totalorder %s149, %s151
      %p158 = scmp.eq.s32.totalorder %s52, 1
      %p159 = por %p157, %p158
      %p160 = scmp.ne.s32.totalorder %s151, %s152
      %p161 = scmp.eq.s32.totalorder %s52, 0
      %p162 = por %p160, %p161
      %p163 = scmp.ne.s32.totalorder %s151, %s152
      %p164 = scmp.eq.s32.totalorder %s53, 1
      %p165 = por %p163, %p164
      %p167 = scmp.ne.s32.totalorder %s152, %s166
      %p168 = scmp.eq.s32.totalorder %s53, 0
      %p169 = por %p167, %p168
      %s171 = sadd.s32 %s170, 1
      %p174 = scmp.eq.s32.totalorder %s47, 1
      %p175 = scmp.ne.s32.totalorder %s170, %s172
      %p176 = scmp.eq.s32.totalorder %s47, 0
      %p177 = por %p175, %p176
      %p178 = scmp.ne.s32.totalorder %s170, %s172
      %p179 = scmp.eq.s32.totalorder %s52, 1
      %p180 = por %p178, %p179
      %p181 = scmp.ne.s32.totalorder %s172, %s173
      %p182 = scmp.eq.s32.totalorder %s52, 0
      %p183 = por %p181, %p182
      %p184 = scmp.ne.s32.totalorder %s172, %s173
      %p185 = scmp.eq.s32.totalorder %s53, 1
      %p186 = por %p184, %p185
      %p188 = scmp.ne.s32.totalorder %s173, %s187
      %p189 = scmp.eq.s32.totalorder %s53, 0
      %p190 = por %p188, %p189
      %s192 = sadd.s32 %s191, 1
      %p195 = scmp.eq.s32.totalorder %s47, 1
      %p196 = scmp.ne.s32.totalorder %s191, %s193
      %p197 = scmp.eq.s32.totalorder %s47, 0
      %p198 = por %p196, %p197
      %p199 = scmp.ne.s32.totalorder %s191, %s193
      %p200 = scmp.eq.s32.totalorder %s52, 1
      %p201 = por %p199, %p200
      %p202 = scmp.ne.s32.totalorder %s193, %s194
      %p203 = scmp.eq.s32.totalorder %s52, 0
      %p204 = por %p202, %p203
      %p205 = scmp.ne.s32.totalorder %s193, %s194
      %p206 = scmp.eq.s32.totalorder %s53, 1
      %p207 = por %p205, %p206
      %p209 = scmp.ne.s32.totalorder %s194, %s208
      %p210 = scmp.eq.s32.totalorder %s53, 0
      %p211 = por %p209, %p210
      %s213 = sadd.s32 %s212, 1
      %p216 = scmp.eq.s32.totalorder %s47, 1
      %p217 = scmp.ne.s32.totalorder %s212, %s214
      %p218 = scmp.eq.s32.totalorder %s47, 0
      %p219 = por %p217, %p218
      %p220 = scmp.ne.s32.totalorder %s212, %s214
      %p221 = scmp.eq.s32.totalorder %s52, 1
      %p222 = por %p220, %p221
      %p223 = scmp.ne.s32.totalorder %s214, %s215
      %p224 = scmp.eq.s32.totalorder %s52, 0
      %p225 = por %p223, %p224
      %p226 = scmp.ne.s32.totalorder %s214, %s215
      %p227 = scmp.eq.s32.totalorder %s53, 1
      %p228 = por %p226, %p227
      %p230 = scmp.ne.s32.totalorder %s215, %s229
      %p231 = scmp.eq.s32.totalorder %s53, 0
      %p232 = por %p230, %p231
      %s234 = sadd.s32 %s233, 1
      %p237 = scmp.eq.s32.totalorder %s47, 1
      %p238 = scmp.ne.s32.totalorder %s233, %s235
      %p239 = scmp.eq.s32.totalorder %s47, 0
      %p240 = por %p238, %p239
      %p241 = scmp.ne.s32.totalorder %s233, %s235
      %p242 = scmp.eq.s32.totalorder %s52, 1
      %p243 = por %p241, %p242
      %p244 = scmp.ne.s32.totalorder %s235, %s236
      %p245 = scmp.eq.s32.totalorder %s52, 0
      %p246 = por %p244, %p245
      %p247 = scmp.ne.s32.totalorder %s235, %s236
      %p248 = scmp.eq.s32.totalorder %s53, 1
      %p249 = por %p247, %p248
      %p251 = scmp.ne.s32.totalorder %s236, %s250
      %p252 = scmp.eq.s32.totalorder %s53, 0
      %p253 = por %p251, %p252
      %s255 = sadd.s32 %s254, 1
      %p258 = scmp.eq.s32.totalorder %s47, 1
      %p259 = scmp.ne.s32.totalorder %s254, %s256
      %p260 = scmp.eq.s32.totalorder %s47, 0
      %p261 = por %p259, %p260
      %p262 = scmp.ne.s32.totalorder %s254, %s256
      %p263 = scmp.eq.s32.totalorder %s52, 1
      %p264 = por %p262, %p263
      %p265 = scmp.ne.s32.totalorder %s256, %s257
      %p266 = scmp.eq.s32.totalorder %s52, 0
      %p267 = por %p265, %p266
      %p268 = scmp.ne.s32.totalorder %s256, %s257
      %p269 = scmp.eq.s32.totalorder %s53, 1
      %p270 = por %p268, %p269
      %p272 = scmp.ne.s32.totalorder %s257, %s271
      %p273 = scmp.eq.s32.totalorder %s53, 0
      %p274 = por %p272, %p273
      %s276 = sadd.s32 %s275, 1
      %p279 = scmp.eq.s32.totalorder %s47, 1
      %p280 = scmp.ne.s32.totalorder %s275, %s277
      %p281 = scmp.eq.s32.totalorder %s47, 0
      %p282 = por %p280, %p281
      %p283 = scmp.ne.s32.totalorder %s275, %s277
      %p284 = scmp.eq.s32.totalorder %s52, 1
      %p285 = por %p283, %p284
      %p286 = scmp.ne.s32.totalorder %s277, %s278
      %p287 = scmp.eq.s32.totalorder %s52, 0
      %p288 = por %p286, %p287
      %p289 = scmp.ne.s32.totalorder %s277, %s278
      %p290 = scmp.eq.s32.totalorder %s53, 1
      %p291 = por %p289, %p290
      %p293 = scmp.ne.s32.totalorder %s278, %s292
      %p294 = scmp.eq.s32.totalorder %s53, 0
      %p295 = por %p293, %p294
      %s297 = sadd.s32 %s296, 1
      %p300 = scmp.eq.s32.totalorder %s47, 1
      %p301 = scmp.ne.s32.totalorder %s296, %s298
      %p302 = scmp.eq.s32.totalorder %s47, 0
      %p303 = por %p301, %p302
      %p304 = scmp.ne.s32.totalorder %s296, %s298
      %p305 = scmp.eq.s32.totalorder %s52, 1
      %p306 = por %p304, %p305
      %p307 = scmp.ne.s32.totalorder %s298, %s299
      %p308 = scmp.eq.s32.totalorder %s52, 0
      %p309 = por %p307, %p308
      %p310 = scmp.ne.s32.totalorder %s298, %s299
      %p311 = scmp.eq.s32.totalorder %s53, 1
      %p312 = por %p310, %p311
      %p314 = scmp.ne.s32.totalorder %s299, %s313
      %p315 = scmp.eq.s32.totalorder %s53, 0
      %p316 = por %p314, %p315
      %s318 = sadd.s32 %s317, 1
      %p321 = scmp.eq.s32.totalorder %s47, 1
      %p322 = scmp.ne.s32.totalorder %s317, %s319
      %p323 = scmp.eq.s32.totalorder %s47, 0
      %p324 = por %p322, %p323
      %p325 = scmp.ne.s32.totalorder %s317, %s319
      %p326 = scmp.eq.s32.totalorder %s52, 1
      %p327 = por %p325, %p326
      %p328 = scmp.ne.s32.totalorder %s319, %s320
      %p329 = scmp.eq.s32.totalorder %s52, 0
      %p330 = por %p328, %p329
      %p331 = scmp.ne.s32.totalorder %s319, %s320
      %p332 = scmp.eq.s32.totalorder %s53, 1
      %p333 = por %p331, %p332
      %p335 = scmp.ne.s32.totalorder %s320, %s334
      %p336 = scmp.eq.s32.totalorder %s53, 0
      %p337 = por %p335, %p336
      %s339 = sadd.s32 %s338, 1
      %p342 = scmp.eq.s32.totalorder %s47, 1
      %p343 = scmp.ne.s32.totalorder %s338, %s340
      %p344 = scmp.eq.s32.totalorder %s47, 0
      %p345 = por %p343, %p344
      %p346 = scmp.ne.s32.totalorder %s338, %s340
      %p347 = scmp.eq.s32.totalorder %s52, 1
      %p348 = por %p346, %p347
      %p349 = scmp.ne.s32.totalorder %s340, %s341
      %p350 = scmp.eq.s32.totalorder %s52, 0
      %p351 = por %p349, %p350
      %p352 = scmp.ne.s32.totalorder %s340, %s341
      %p353 = scmp.eq.s32.totalorder %s53, 1
      %p354 = por %p352, %p353
      %p356 = scmp.ne.s32.totalorder %s341, %s355
      %p357 = scmp.eq.s32.totalorder %s53, 0
      %p358 = por %p356, %p357
      %s360 = sadd.s32 %s359, 1
      %p363 = scmp.eq.s32.totalorder %s47, 1
      %p364 = scmp.ne.s32.totalorder %s359, %s361
      %p365 = scmp.eq.s32.totalorder %s47, 0
      %p366 = por %p364, %p365
      %p367 = scmp.ne.s32.totalorder %s359, %s361
      %p368 = scmp.eq.s32.totalorder %s52, 1
      %p369 = por %p367, %p368
      %p370 = scmp.ne.s32.totalorder %s361, %s362
      %p371 = scmp.eq.s32.totalorder %s52, 0
      %p372 = por %p370, %p371
      %p373 = scmp.ne.s32.totalorder %s361, %s362
      %p374 = scmp.eq.s32.totalorder %s53, 1
      %p375 = por %p373, %p374
      %p377 = scmp.ne.s32.totalorder %s362, %s376
      %p378 = scmp.eq.s32.totalorder %s53, 0
      %p379 = por %p377, %p378
      %s381 = sadd.s32 %s380, 1
      %p384 = scmp.eq.s32.totalorder %s47, 1
      %p385 = scmp.ne.s32.totalorder %s380, %s382
      %p386 = scmp.eq.s32.totalorder %s47, 0
      %p387 = por %p385, %p386
      %p388 = scmp.ne.s32.totalorder %s380, %s382
      %p389 = scmp.eq.s32.totalorder %s52, 1
      %p390 = por %p388, %p389
      %p391 = scmp.ne.s32.totalorder %s382, %s383
      %p392 = scmp.eq.s32.totalorder %s52, 0
      %p393 = por %p391, %p392
      %p394 = scmp.ne.s32.totalorder %s382, %s383
      %p395 = scmp.eq.s32.totalorder %s53, 1
      %p396 = por %p394, %p395
      %p398 = scmp.ne.s32.totalorder %s383, %s397
      %p399 = scmp.eq.s32.totalorder %s53, 0
      %p400 = por %p398, %p399
      %s402 = sadd.s32 %s401, 1
      %p405 = scmp.eq.s32.totalorder %s47, 1
      %p406 = scmp.ne.s32.totalorder %s401, %s403
      %p407 = scmp.eq.s32.totalorder %s47, 0
      %p408 = por %p406, %p407
      %p409 = scmp.ne.s32.totalorder %s401, %s403
      %p410 = scmp.eq.s32.totalorder %s52, 1
      %p411 = por %p409, %p410
      %p412 = scmp.ne.s32.totalorder %s403, %s404
      %p413 = scmp.eq.s32.totalorder %s52, 0
      %p414 = por %p412, %p413
      %p415 = scmp.ne.s32.totalorder %s403, %s404
      %p416 = scmp.eq.s32.totalorder %s53, 1
      %p417 = por %p415, %p416
      %p419 = scmp.ne.s32.totalorder %s404, %s418
      %p420 = scmp.eq.s32.totalorder %s53, 0
      %p421 = por %p419, %p420
      %s423 = sadd.s32 %s422, 1
      %p426 = scmp.eq.s32.totalorder %s47, 1
      %p427 = scmp.ne.s32.totalorder %s422, %s424
      %p428 = scmp.eq.s32.totalorder %s47, 0
      %p429 = por %p427, %p428
      %p430 = scmp.ne.s32.totalorder %s422, %s424
      %p431 = scmp.eq.s32.totalorder %s52, 1
      %p432 = por %p430, %p431
      %p433 = scmp.ne.s32.totalorder %s424, %s425
      %p434 = scmp.eq.s32.totalorder %s52, 0
      %p435 = por %p433, %p434
      %p436 = scmp.ne.s32.totalorder %s424, %s425
      %p437 = scmp.eq.s32.totalorder %s53, 1
      %p438 = por %p436, %p437
      %p440 = scmp.ne.s32.totalorder %s425, %s439
      %p441 = scmp.eq.s32.totalorder %s53, 0
      %p442 = por %p440, %p441
      %s444 = sadd.s32 %s443, 1
      %p447 = scmp.eq.s32.totalorder %s47, 1
      %p448 = scmp.ne.s32.totalorder %s443, %s445
      %p449 = scmp.eq.s32.totalorder %s47, 0
      %p450 = por %p448, %p449
      %p451 = scmp.ne.s32.totalorder %s443, %s445
      %p452 = scmp.eq.s32.totalorder %s52, 1
      %p453 = por %p451, %p452
      %p454 = scmp.ne.s32.totalorder %s445, %s446
      %p455 = scmp.eq.s32.totalorder %s52, 0
      %p456 = por %p454, %p455
      %p457 = scmp.ne.s32.totalorder %s445, %s446
      %p458 = scmp.eq.s32.totalorder %s53, 1
      %p459 = por %p457, %p458
      %p461 = scmp.ne.s32.totalorder %s446, %s460
      %p462 = scmp.eq.s32.totalorder %s53, 0
      %p463 = por %p461, %p462
      %s465 = sadd.s32 %s464, 1
      %p468 = scmp.eq.s32.totalorder %s47, 1
      %p469 = scmp.ne.s32.totalorder %s464, %s466
      %p470 = scmp.eq.s32.totalorder %s47, 0
      %p471 = por %p469, %p470
      %p472 = scmp.ne.s32.totalorder %s464, %s466
      %p473 = scmp.eq.s32.totalorder %s52, 1
      %p474 = por %p472, %p473
      %p475 = scmp.ne.s32.totalorder %s466, %s467
      %p476 = scmp.eq.s32.totalorder %s52, 0
      %p477 = por %p475, %p476
      %p478 = scmp.ne.s32.totalorder %s466, %s467
      %p479 = scmp.eq.s32.totalorder %s53, 1
      %p480 = por %p478, %p479
      %p482 = scmp.ne.s32.totalorder %s467, %s481
      %p483 = scmp.eq.s32.totalorder %s53, 0
      %p484 = por %p482, %p483
      %s486 = sadd.s32 %s485, 1
      %p489 = scmp.eq.s32.totalorder %s47, 1
      %p490 = scmp.ne.s32.totalorder %s485, %s487
      %p491 = scmp.eq.s32.totalorder %s47, 0
      %p492 = por %p490, %p491
      %p493 = scmp.ne.s32.totalorder %s485, %s487
      %p494 = scmp.eq.s32.totalorder %s52, 1
      %p495 = por %p493, %p494
      %p496 = scmp.ne.s32.totalorder %s487, %s488
      %p497 = scmp.eq.s32.totalorder %s52, 0
      %p498 = por %p496, %p497
      %p499 = scmp.ne.s32.totalorder %s487, %s488
      %p500 = scmp.eq.s32.totalorder %s53, 1
      %p501 = por %p499, %p500
      %p503 = scmp.ne.s32.totalorder %s488, %s502
      %p504 = scmp.eq.s32.totalorder %s53, 0
      %p505 = por %p503, %p504
      %s507 = sadd.s32 %s506, 1
      %p510 = scmp.eq.s32.totalorder %s47, 1
      %p511 = scmp.ne.s32.totalorder %s506, %s508
      %p512 = scmp.eq.s32.totalorder %s47, 0
      %p513 = por %p511, %p512
      %p514 = scmp.ne.s32.totalorder %s506, %s508
      %p515 = scmp.eq.s32.totalorder %s52, 1
      %p516 = por %p514, %p515
      %p517 = scmp.ne.s32.totalorder %s508, %s509
      %p518 = scmp.eq.s32.totalorder %s52, 0
      %p519 = por %p517, %p518
      %p520 = scmp.ne.s32.totalorder %s508, %s509
      %p521 = scmp.eq.s32.totalorder %s53, 1
      %p522 = por %p520, %p521
      %p524 = scmp.ne.s32.totalorder %s509, %s523
      %p525 = scmp.eq.s32.totalorder %s53, 0
      %p526 = por %p524, %p525
      %s528 = sadd.s32 %s527, 1
      %p531 = scmp.eq.s32.totalorder %s47, 1
      %p532 = scmp.ne.s32.totalorder %s527, %s529
      %p533 = scmp.eq.s32.totalorder %s47, 0
      %p534 = por %p532, %p533
      %p535 = scmp.ne.s32.totalorder %s527, %s529
      %p536 = scmp.eq.s32.totalorder %s52, 1
      %p537 = por %p535, %p536
      %p538 = scmp.ne.s32.totalorder %s529, %s530
      %p539 = scmp.eq.s32.totalorder %s52, 0
      %p540 = por %p538, %p539
      %p541 = scmp.ne.s32.totalorder %s529, %s530
      %p542 = scmp.eq.s32.totalorder %s53, 1
      %p543 = por %p541, %p542
      %p545 = scmp.ne.s32.totalorder %s530, %s544
      %p546 = scmp.eq.s32.totalorder %s53, 0
      %p547 = por %p545, %p546
      %s549 = sadd.s32 %s548, 1
      %p552 = scmp.eq.s32.totalorder %s47, 1
      %p553 = scmp.ne.s32.totalorder %s548, %s550
      %p554 = scmp.eq.s32.totalorder %s47, 0
      %p555 = por %p553, %p554
      %p556 = scmp.ne.s32.totalorder %s548, %s550
      %p557 = scmp.eq.s32.totalorder %s52, 1
      %p558 = por %p556, %p557
      %p559 = scmp.ne.s32.totalorder %s550, %s551
      %p560 = scmp.eq.s32.totalorder %s52, 0
      %p561 = por %p559, %p560
      %p562 = scmp.ne.s32.totalorder %s550, %s551
      %p563 = scmp.eq.s32.totalorder %s53, 1
      %p564 = por %p562, %p563
      %p566 = scmp.ne.s32.totalorder %s551, %s565
      %p567 = scmp.eq.s32.totalorder %s53, 0
      %p568 = por %p566, %p567
      %s570 = sadd.s32 %s569, 1
      %p573 = scmp.eq.s32.totalorder %s47, 1
      %p574 = scmp.ne.s32.totalorder %s569, %s571
      %p575 = scmp.eq.s32.totalorder %s47, 0
      %p576 = por %p574, %p575
      %p577 = scmp.ne.s32.totalorder %s569, %s571
      %p578 = scmp.eq.s32.totalorder %s52, 1
      %p579 = por %p577, %p578
      %p580 = scmp.ne.s32.totalorder %s571, %s572
      %p581 = scmp.eq.s32.totalorder %s52, 0
      %p582 = por %p580, %p581
      %p583 = scmp.ne.s32.totalorder %s571, %s572
      %p584 = scmp.eq.s32.totalorder %s53, 1
      %p585 = por %p583, %p584
      %p587 = scmp.ne.s32.totalorder %s572, %s586
      %p588 = scmp.eq.s32.totalorder %s53, 0
      %p589 = por %p587, %p588
      %s591 = sadd.s32 %s590, 1
      %p594 = scmp.eq.s32.totalorder %s47, 1
      %p595 = scmp.ne.s32.totalorder %s590, %s592
      %p596 = scmp.eq.s32.totalorder %s47, 0
      %p597 = por %p595, %p596
      %p598 = scmp.ne.s32.totalorder %s590, %s592
      %p599 = scmp.eq.s32.totalorder %s52, 1
      %p600 = por %p598, %p599
      %p601 = scmp.ne.s32.totalorder %s592, %s593
      %p602 = scmp.eq.s32.totalorder %s52, 0
      %p603 = por %p601, %p602
      %p604 = scmp.ne.s32.totalorder %s592, %s593
      %p605 = scmp.eq.s32.totalorder %s53, 1
      %p606 = por %p604, %p605
      %p608 = scmp.ne.s32.totalorder %s593, %s607
      %p609 = scmp.eq.s32.totalorder %s53, 0
      %p610 = por %p608, %p609
      %s612 = sadd.s32 %s611, 1
      %p615 = scmp.eq.s32.totalorder %s47, 1
      %p616 = scmp.ne.s32.totalorder %s611, %s613
      %p617 = scmp.eq.s32.totalorder %s47, 0
      %p618 = por %p616, %p617
      %p619 = scmp.ne.s32.totalorder %s611, %s613
      %p620 = scmp.eq.s32.totalorder %s52, 1
      %p621 = por %p619, %p620
      %p622 = scmp.ne.s32.totalorder %s613, %s614
      %p623 = scmp.eq.s32.totalorder %s52, 0
      %p624 = por %p622, %p623
      %p625 = scmp.ne.s32.totalorder %s613, %s614
      %p626 = scmp.eq.s32.totalorder %s53, 1
      %p627 = por %p625, %p626
      %p629 = scmp.ne.s32.totalorder %s614, %s628
      %p630 = scmp.eq.s32.totalorder %s53, 0
      %p631 = por %p629, %p630
      %s633 = sadd.s32 %s632, 1
      %p636 = scmp.eq.s32.totalorder %s47, 1
      %p637 = scmp.ne.s32.totalorder %s632, %s634
      %p638 = scmp.eq.s32.totalorder %s47, 0
      %p639 = por %p637, %p638
      %p640 = scmp.ne.s32.totalorder %s632, %s634
      %p641 = scmp.eq.s32.totalorder %s52, 1
      %p642 = por %p640, %p641
      %p643 = scmp.ne.s32.totalorder %s634, %s635
      %p644 = scmp.eq.s32.totalorder %s52, 0
      %p645 = por %p643, %p644
      %p646 = scmp.ne.s32.totalorder %s634, %s635
      %p647 = scmp.eq.s32.totalorder %s53, 1
      %p648 = por %p646, %p647
      %p650 = scmp.ne.s32.totalorder %s635, %s649
      %p651 = scmp.eq.s32.totalorder %s53, 0
      %p652 = por %p650, %p651
      %s653 = ssub.s32 %s47, %s54
      %p654 = scmp.eq.s32.totalorder %s653, 0
      %s656 = sadd.s32 %s655, 1
      %s657 = scalar_select %p654, %s655, %s656
      %p660 = pneg %p654
      %p661 = scmp.eq.s32.totalorder %s47, 1
      %p662 = por %p660, %p661
      %p663 = scmp.ne.s32.totalorder %s655, %s658
      %p664 = scmp.eq.s32.totalorder %s47, 0
      %p665 = por %p663, %p664
      %p666 = scmp.ne.s32.totalorder %s655, %s658
      %p667 = scmp.eq.s32.totalorder %s52, 1
      %p668 = por %p666, %p667
      %p669 = scmp.ne.s32.totalorder %s658, %s659
      %p670 = scmp.eq.s32.totalorder %s52, 0
      %p671 = por %p669, %p670
      %p672 = scmp.ne.s32.totalorder %s658, %s659
      %p673 = scmp.eq.s32.totalorder %s53, 1
      %p674 = por %p672, %p673
      %p676 = scmp.ne.s32.totalorder %s659, %s675
      %p677 = scmp.eq.s32.totalorder %s53, 0
      %p678 = por %p676, %p677
      %p679 = scmp.le.s32.totalorder 1, %s47
      %p680 = scmp.lt.s32.totalorder %s47, 3
      %p681 = pnand %p679, %p680
      %p682 = pneg %p681
      // Predicated region
      $region9: #{_lambda_.1} parent=5 // pred_check
        _
      $region10: #{_lambda_.1} parent=5 // pred_check_branch
        %684 = sbr.rel (%p681) target = $region12
      $region11: #{_lambda_.1} parent=5 // pred_region
        %s685 = ssub.s32 %s47, 1
        // Predicated region
        $region13: #{_lambda_.1} parent=11 // pred_check
          %p686 = pneg %p120
        $region14: #{_lambda_.1} parent=11 // pred_check_branch
          %688 = sbr.rel (%p686) target = $region16
        $region15: #{_lambda_.1} parent=11 // pred_region
          _
        $region16: #{_lambda_.1} parent=11 // pred_fallthru
          _
        // Predicated region
        $region17: #{_lambda_.1} parent=11 // pred_check
          %p689 = pneg %p141
        $region18: #{_lambda_.1} parent=11 // pred_check_branch
          %691 = sbr.rel (%p689) target = $region20
        $region19: #{_lambda_.1} parent=11 // pred_region
          _
        $region20: #{_lambda_.1} parent=11 // pred_fallthru
          _
        // Predicated region
        $region21: #{_lambda_.1} parent=11 // pred_check
          %p692 = pneg %p162
        $region22: #{_lambda_.1} parent=11 // pred_check_branch
          %694 = sbr.rel (%p692) target = $region24
        $region23: #{_lambda_.1} parent=11 // pred_region
          _
        $region24: #{_lambda_.1} parent=11 // pred_fallthru
          _
        // Predicated region
        $region25: #{_lambda_.1} parent=11 // pred_check
          %p695 = pneg %p183
        $region26: #{_lambda_.1} parent=11 // pred_check_branch
          %697 = sbr.rel (%p695) target = $region28
        $region27: #{_lambda_.1} parent=11 // pred_region
          _
        $region28: #{_lambda_.1} parent=11 // pred_fallthru
          _
        // Predicated region
        $region29: #{_lambda_.1} parent=11 // pred_check
          %p698 = pneg %p204
        $region30: #{_lambda_.1} parent=11 // pred_check_branch
          %700 = sbr.rel (%p698) target = $region32
        $region31: #{_lambda_.1} parent=11 // pred_region
          %702 = vsyncadd [#allocation3], 0
          %s703 = sshll.u32 %s6, 4
          %s704 = int_to_ptr.hbm [resolvable:$true] %s703
          %s705 = sshll.u32 [#allocation2], 4
          %s706 = int_to_ptr.vmem [resolvable:$true] %s705
          %711 = dma.hbm_to_vmem [thread:$0]  %s704, 256, %s706, [#allocation3], 64, 64, 4
        $region32: #{_lambda_.1} parent=11 // pred_fallthru
          _
        // Predicated region
        $region33: #{_lambda_.1} parent=11 // pred_check
          %p712 = pneg %p225
        $region34: #{_lambda_.1} parent=11 // pred_check_branch
          %714 = sbr.rel (%p712) target = $region36
        $region35: #{_lambda_.1} parent=11 // pred_region
          _
        $region36: #{_lambda_.1} parent=11 // pred_fallthru
          _
        // Predicated region
        $region37: #{_lambda_.1} parent=11 // pred_check
          %p715 = pneg %p246
        $region38: #{_lambda_.1} parent=11 // pred_check_branch
          %717 = sbr.rel (%p715) target = $region40
        $region39: #{_lambda_.1} parent=11 // pred_region
          %719 = vsyncadd [#allocation6], 0
          %s720 = sshll.u32 %s8, 4
          %s721 = int_to_ptr.hbm [resolvable:$true] %s720
          %s722 = sshll.u32 [#allocation5], 4
          %s723 = int_to_ptr.vmem [resolvable:$true] %s722
          %728 = dma.hbm_to_vmem [thread:$0]  %s721, 256, %s723, [#allocation6], 64, 64, 4
        $region40: #{_lambda_.1} parent=11 // pred_fallthru
          _
        // Predicated region
        $region41: #{_lambda_.1} parent=11 // pred_check
          %p729 = pneg %p267
        $region42: #{_lambda_.1} parent=11 // pred_check_branch
          %731 = sbr.rel (%p729) target = $region44
        $region43: #{_lambda_.1} parent=11 // pred_region
          _
        $region44: #{_lambda_.1} parent=11 // pred_fallthru
          _
        // Predicated region
        $region45: #{_lambda_.1} parent=11 // pred_check
          %p732 = pneg %p288
        $region46: #{_lambda_.1} parent=11 // pred_check_branch
          %734 = sbr.rel (%p732) target = $region48
        $region47: #{_lambda_.1} parent=11 // pred_region
          %736 = vsyncadd [#allocation6], 0
          %s738 = sshll.u32 %s10, 4
          %s739 = int_to_ptr.hbm [resolvable:$true] %s738
          %s740 = sshll.u32 [#allocation7], 4
          %s741 = int_to_ptr.vmem [resolvable:$true] %s740
          %743 = dma.hbm_to_vmem [thread:$0]  %s739, 16, %s741, [#allocation6]
        $region48: #{_lambda_.1} parent=11 // pred_fallthru
          _
        // Predicated region
        $region49: #{_lambda_.1} parent=11 // pred_check
          %p744 = pneg %p309
        $region50: #{_lambda_.1} parent=11 // pred_check_branch
          %746 = sbr.rel (%p744) target = $region52
        $region51: #{_lambda_.1} parent=11 // pred_region
          %748 = vsyncadd [#allocation9], 0
          %s750 = sshll.u32 %s11, 4
          %s751 = int_to_ptr.hbm [resolvable:$true] %s750
          %s752 = sshll.u32 [#allocation8], 4
          %s753 = int_to_ptr.vmem [resolvable:$true] %s752
          %755 = dma.hbm_to_vmem [thread:$0]  %s751, 16, %s753, [#allocation9]
        $region52: #{_lambda_.1} parent=11 // pred_fallthru
          _
        // Predicated region
        $region53: #{_lambda_.1} parent=11 // pred_check
          %p756 = pneg %p330
        $region54: #{_lambda_.1} parent=11 // pred_check_branch
          %758 = sbr.rel (%p756) target = $region56
        $region55: #{_lambda_.1} parent=11 // pred_region
          %760 = vsyncadd [#allocation9], 0
          %s761 = sshll.u32 %s12, 4
          %s762 = int_to_ptr.hbm [resolvable:$true] %s761
          %s763 = sshll.u32 [#allocation10], 4
          %s764 = int_to_ptr.vmem [resolvable:$true] %s763
          %769 = dma.hbm_to_vmem [thread:$0]  %s762, 256, %s764, [#allocation9], 64, 64, 4
        $region56: #{_lambda_.1} parent=11 // pred_fallthru
          _
        // Predicated region
        $region57: #{_lambda_.1} parent=11 // pred_check
          %p770 = pneg %p351
        $region58: #{_lambda_.1} parent=11 // pred_check_branch
          %772 = sbr.rel (%p770) target = $region60
        $region59: #{_lambda_.1} parent=11 // pred_region
          %774 = vsyncadd [#allocation12], 0
          %s776 = sshll.u32 %s13, 4
          %s777 = int_to_ptr.hbm [resolvable:$true] %s776
          %s778 = sshll.u32 [#allocation11], 4
          %s779 = int_to_ptr.vmem [resolvable:$true] %s778
          %781 = dma.hbm_to_vmem [thread:$0]  %s777, 16, %s779, [#allocation12]
        $region60: #{_lambda_.1} parent=11 // pred_fallthru
          _
        // Predicated region
        $region61: #{_lambda_.1} parent=11 // pred_check
          %p782 = pneg %p372
        $region62: #{_lambda_.1} parent=11 // pred_check_branch
          %784 = sbr.rel (%p782) target = $region64
        $region63: #{_lambda_.1} parent=11 // pred_region
          %786 = vsyncadd [#allocation12], 0
          %s787 = sshll.u32 %s14, 4
          %s788 = int_to_ptr.hbm [resolvable:$true] %s787
          %s789 = sshll.u32 [#allocation13], 4
          %s790 = int_to_ptr.vmem [resolvable:$true] %s789
          %795 = dma.hbm_to_vmem [thread:$0]  %s788, 256, %s790, [#allocation12], 64, 64, 4
        $region64: #{_lambda_.1} parent=11 // pred_fallthru
          _
        // Predicated region
        $region65: #{_lambda_.1} parent=11 // pred_check
          %p796 = pneg %p393
        $region66: #{_lambda_.1} parent=11 // pred_check_branch
          %798 = sbr.rel (%p796) target = $region68
        $region67: #{_lambda_.1} parent=11 // pred_region
          %800 = vsyncadd [#allocation15], 0
          %s802 = sshll.u32 %s15, 4
          %s803 = int_to_ptr.hbm [resolvable:$true] %s802
          %s804 = sshll.u32 [#allocation14], 4
          %s805 = int_to_ptr.vmem [resolvable:$true] %s804
          %807 = dma.hbm_to_vmem [thread:$0]  %s803, 16, %s805, [#allocation15]
        $region68: #{_lambda_.1} parent=11 // pred_fallthru
          _
        // Predicated region
        $region69: #{_lambda_.1} parent=11 // pred_check
          %p808 = pneg %p414
        $region70: #{_lambda_.1} parent=11 // pred_check_branch
          %810 = sbr.rel (%p808) target = $region72
        $region71: #{_lambda_.1} parent=11 // pred_region
          %812 = vsyncadd [#allocation15], 0
          %s813 = sshll.u32 %s16, 4
          %s814 = int_to_ptr.hbm [resolvable:$true] %s813
          %s815 = sshll.u32 [#allocation16], 4
          %s816 = int_to_ptr.vmem [resolvable:$true] %s815
          %821 = dma.hbm_to_vmem [thread:$0]  %s814, 256, %s816, [#allocation15], 64, 64, 4
        $region72: #{_lambda_.1} parent=11 // pred_fallthru
          _
        // Predicated region
        $region73: #{_lambda_.1} parent=11 // pred_check
          %p822 = pneg %p435
        $region74: #{_lambda_.1} parent=11 // pred_check_branch
          %824 = sbr.rel (%p822) target = $region76
        $region75: #{_lambda_.1} parent=11 // pred_region
          %826 = vsyncadd [#allocation18], 0
          %s828 = sshll.u32 %s17, 4
          %s829 = int_to_ptr.hbm [resolvable:$true] %s828
          %s830 = sshll.u32 [#allocation17], 4
          %s831 = int_to_ptr.vmem [resolvable:$true] %s830
          %833 = dma.hbm_to_vmem [thread:$0]  %s829, 16, %s831, [#allocation18]
        $region76: #{_lambda_.1} parent=11 // pred_fallthru
          _
        // Predicated region
        $region77: #{_lambda_.1} parent=11 // pred_check
          %p834 = pneg %p456
        $region78: #{_lambda_.1} parent=11 // pred_check_branch
          %836 = sbr.rel (%p834) target = $region80
        $region79: #{_lambda_.1} parent=11 // pred_region
          %838 = vsyncadd [#allocation18], 0
          %s839 = sshll.u32 %s18, 4
          %s840 = int_to_ptr.hbm [resolvable:$true] %s839
          %s841 = sshll.u32 [#allocation19], 4
          %s842 = int_to_ptr.vmem [resolvable:$true] %s841
          %847 = dma.hbm_to_vmem [thread:$0]  %s840, 256, %s842, [#allocation18], 64, 64, 4
        $region80: #{_lambda_.1} parent=11 // pred_fallthru
          _
        // Predicated region
        $region81: #{_lambda_.1} parent=11 // pred_check
          %p848 = pneg %p477
        $region82: #{_lambda_.1} parent=11 // pred_check_branch
          %850 = sbr.rel (%p848) target = $region84
        $region83: #{_lambda_.1} parent=11 // pred_region
          %852 = vsyncadd [#allocation21], 0
          %s854 = sshll.u32 %s19, 4
          %s855 = int_to_ptr.hbm [resolvable:$true] %s854
          %s856 = sshll.u32 [#allocation20], 4
          %s857 = int_to_ptr.vmem [resolvable:$true] %s856
          %859 = dma.hbm_to_vmem [thread:$0]  %s855, 16, %s857, [#allocation21]
        $region84: #{_lambda_.1} parent=11 // pred_fallthru
          _
        // Predicated region
        $region85: #{_lambda_.1} parent=11 // pred_check
          %p860 = pneg %p498
        $region86: #{_lambda_.1} parent=11 // pred_check_branch
          %862 = sbr.rel (%p860) target = $region88
        $region87: #{_lambda_.1} parent=11 // pred_region
          %864 = vsyncadd [#allocation21], 0
          %s866 = sshll.u32 %s20, 4
          %s867 = int_to_ptr.hbm [resolvable:$true] %s866
          %s868 = sshll.u32 [#allocation22], 4
          %s869 = int_to_ptr.vmem [resolvable:$true] %s868
          %871 = dma.hbm_to_vmem [thread:$0]  %s867, 16, %s869, [#allocation21]
        $region88: #{_lambda_.1} parent=11 // pred_fallthru
          _
        // Predicated region
        $region89: #{_lambda_.1} parent=11 // pred_check
          %p872 = pneg %p519
        $region90: #{_lambda_.1} parent=11 // pred_check_branch
          %874 = sbr.rel (%p872) target = $region92
        $region91: #{_lambda_.1} parent=11 // pred_region
          %876 = vsyncadd [#allocation24], 0
          %s878 = sshll.u32 %s21, 4
          %s879 = int_to_ptr.hbm [resolvable:$true] %s878
          %s880 = sshll.u32 [#allocation23], 4
          %s881 = int_to_ptr.vmem [resolvable:$true] %s880
          %883 = dma.hbm_to_vmem [thread:$0]  %s879, 16, %s881, [#allocation24]
        $region92: #{_lambda_.1} parent=11 // pred_fallthru
          _
        // Predicated region
        $region93: #{_lambda_.1} parent=11 // pred_check
          %p884 = pneg %p540
        $region94: #{_lambda_.1} parent=11 // pred_check_branch
          %886 = sbr.rel (%p884) target = $region96
        $region95: #{_lambda_.1} parent=11 // pred_region
          %888 = vsyncadd [#allocation24], 0
          %s889 = sshll.u32 %s22, 4
          %s890 = int_to_ptr.hbm [resolvable:$true] %s889
          %s891 = sshll.u32 [#allocation25], 4
          %s892 = int_to_ptr.vmem [resolvable:$true] %s891
          %897 = dma.hbm_to_vmem [thread:$0]  %s890, 256, %s892, [#allocation24], 64, 64, 4
        $region96: #{_lambda_.1} parent=11 // pred_fallthru
          _
        // Predicated region
        $region97: #{_lambda_.1} parent=11 // pred_check
          %p898 = pneg %p561
        $region98: #{_lambda_.1} parent=11 // pred_check_branch
          %900 = sbr.rel (%p898) target = $region100
        $region99: #{_lambda_.1} parent=11 // pred_region
          %902 = vsyncadd [#allocation27], 0
          %s904 = sshll.u32 %s23, 4
          %s905 = int_to_ptr.hbm [resolvable:$true] %s904
          %s906 = sshll.u32 [#allocation26], 4
          %s907 = int_to_ptr.vmem [resolvable:$true] %s906
          %909 = dma.hbm_to_vmem [thread:$0]  %s905, 16, %s907, [#allocation27]
        $region100: #{_lambda_.1} parent=11 // pred_fallthru
          _
        // Predicated region
        $region101: #{_lambda_.1} parent=11 // pred_check
          %p910 = pneg %p582
        $region102: #{_lambda_.1} parent=11 // pred_check_branch
          %912 = sbr.rel (%p910) target = $region104
        $region103: #{_lambda_.1} parent=11 // pred_region
          _
        $region104: #{_lambda_.1} parent=11 // pred_fallthru
          _
        // Predicated region
        $region105: #{_lambda_.1} parent=11 // pred_check
          %p913 = pneg %p603
        $region106: #{_lambda_.1} parent=11 // pred_check_branch
          %915 = sbr.rel (%p913) target = $region108
        $region107: #{_lambda_.1} parent=11 // pred_region
          %917 = vsyncadd [#allocation27], 0
          %s919 = sshll.u32 %s25, 4
          %s920 = int_to_ptr.hbm [resolvable:$true] %s919
          %s921 = sshll.u32 [#allocation28], 4
          %s922 = int_to_ptr.vmem [resolvable:$true] %s921
          %924 = dma.hbm_to_vmem [thread:$0]  %s920, 16, %s922, [#allocation27]
        $region108: #{_lambda_.1} parent=11 // pred_fallthru
          _
        // Predicated region
        $region109: #{_lambda_.1} parent=11 // pred_check
          %p925 = pneg %p624
        $region110: #{_lambda_.1} parent=11 // pred_check_branch
          %927 = sbr.rel (%p925) target = $region112
        $region111: #{_lambda_.1} parent=11 // pred_region
          %929 = vsyncadd [#allocation30], 0
          %s931 = sshll.u32 %s26, 4
          %s932 = int_to_ptr.hbm [resolvable:$true] %s931
          %s933 = sshll.u32 [#allocation29], 4
          %s934 = int_to_ptr.vmem [resolvable:$true] %s933
          %936 = dma.hbm_to_vmem [thread:$0]  %s932, 16, %s934, [#allocation30]
        $region112: #{_lambda_.1} parent=11 // pred_fallthru
          _
        // Predicated region
        $region113: #{_lambda_.1} parent=11 // pred_check
          %p937 = pneg %p645
        $region114: #{_lambda_.1} parent=11 // pred_check_branch
          %939 = sbr.rel (%p937) target = $region116
        $region115: #{_lambda_.1} parent=11 // pred_region
          %941 = vsyncadd [#allocation30], 0
          %s943 = sshll.u32 %s27, 4
          %s944 = int_to_ptr.hbm [resolvable:$true] %s943
          %s945 = sshll.u32 [#allocation31], 4
          %s946 = int_to_ptr.vmem [resolvable:$true] %s945
          %948 = dma.hbm_to_vmem [thread:$0]  %s944, 16, %s946, [#allocation30]
        $region116: #{_lambda_.1} parent=11 // pred_fallthru
          _
      $region12: #{_lambda_.1} parent=5 // pred_fallthru
        _
      %p949 = scmp.lt.s32.totalorder %s47, 2
      // Predicated region
      $region117: #{_lambda_.1} parent=5 // pred_check
        %p950 = pneg %p949
      $region118: #{_lambda_.1} parent=5 // pred_check_branch
        %952 = sbr.rel (%p950) target = $region120
      $region119: #{_lambda_.1} parent=5 // pred_region
        // Predicated region
        $region121: #{_lambda_.1} parent=119 // pred_check
          %p953 = pneg %p67
        $region122: #{_lambda_.1} parent=119 // pred_check_branch
          %955 = sbr.rel (%p953) target = $region124
        $region123: #{_lambda_.1} parent=119 // pred_region
          %p956 = scmp.lt.s32.totalorder %s47, 1
          %s957 = scalar_select %p956, %s47, 1
          %s958 = smul.addr %s957, 8
          %s959 = scalar_lea.vmem %s0, %s958
        $region124: #{_lambda_.1} parent=119 // pred_fallthru
          _
        // Predicated region
        $region125: #{_lambda_.1} parent=119 // pred_check
          %p960 = pneg %p93
        $region126: #{_lambda_.1} parent=119 // pred_check_branch
          %962 = sbr.rel (%p960) target = $region128
        $region127: #{_lambda_.1} parent=119 // pred_region
          %p963 = scmp.lt.s32.totalorder %s47, 1
          %s964 = scalar_select %p963, %s47, 1
          %s965 = smul.addr %s964, 8
          %s966 = scalar_lea.vmem %s1, %s965
        $region128: #{_lambda_.1} parent=119 // pred_fallthru
          _
      $region120: #{_lambda_.1} parent=5 // pred_fallthru
        _
      %p967 = scmp.le.s32.totalorder 1, %s47
      %p968 = scmp.lt.s32.totalorder %s47, 3
      %p969 = pnand %p967, %p968
      %p970 = pneg %p969
      // Predicated region
      $region129: #{_lambda_.1} parent=5 // pred_check
        _
      $region130: #{_lambda_.1} parent=5 // pred_check_branch
        %972 = sbr.rel (%p969) target = $region132
      $region131: #{_lambda_.1} parent=5 // pred_region
        %s973 = ssub.s32 %s47, 1
        // Predicated region
        $region133: #{_lambda_.1} parent=131 // pred_check
          %p974 = pneg %p204
        $region134: #{_lambda_.1} parent=131 // pred_check_branch
          %976 = sbr.rel (%p974) target = $region136
        $region135: #{_lambda_.1} parent=131 // pred_region
          %978 = dma.done [#allocation3], 256
        $region136: #{_lambda_.1} parent=131 // pred_fallthru
          _
        // Predicated region
        $region137: #{_lambda_.1} parent=131 // pred_check
          %p979 = pneg %p246
        $region138: #{_lambda_.1} parent=131 // pred_check_branch
          %981 = sbr.rel (%p979) target = $region140
        $region139: #{_lambda_.1} parent=131 // pred_region
          %983 = dma.done [#allocation6], 256
        $region140: #{_lambda_.1} parent=131 // pred_fallthru
          _
        // Predicated region
        $region141: #{_lambda_.1} parent=131 // pred_check
          %p984 = pneg %p288
        $region142: #{_lambda_.1} parent=131 // pred_check_branch
          %986 = sbr.rel (%p984) target = $region144
        $region143: #{_lambda_.1} parent=131 // pred_region
          %988 = dma.done [#allocation6], 16
        $region144: #{_lambda_.1} parent=131 // pred_fallthru
          _
        // Predicated region
        $region145: #{_lambda_.1} parent=131 // pred_check
          %p989 = pneg %p309
        $region146: #{_lambda_.1} parent=131 // pred_check_branch
          %991 = sbr.rel (%p989) target = $region148
        $region147: #{_lambda_.1} parent=131 // pred_region
          %993 = dma.done [#allocation9], 16
        $region148: #{_lambda_.1} parent=131 // pred_fallthru
          _
        // Predicated region
        $region149: #{_lambda_.1} parent=131 // pred_check
          %p994 = pneg %p330
        $region150: #{_lambda_.1} parent=131 // pred_check_branch
          %996 = sbr.rel (%p994) target = $region152
        $region151: #{_lambda_.1} parent=131 // pred_region
          %998 = dma.done [#allocation9], 256
        $region152: #{_lambda_.1} parent=131 // pred_fallthru
          _
        // Predicated region
        $region153: #{_lambda_.1} parent=131 // pred_check
          %p999 = pneg %p351
        $region154: #{_lambda_.1} parent=131 // pred_check_branch
          %1001 = sbr.rel (%p999) target = $region156
        $region155: #{_lambda_.1} parent=131 // pred_region
          %1003 = dma.done [#allocation12], 16
        $region156: #{_lambda_.1} parent=131 // pred_fallthru
          _
        // Predicated region
        $region157: #{_lambda_.1} parent=131 // pred_check
          %p1004 = pneg %p372
        $region158: #{_lambda_.1} parent=131 // pred_check_branch
          %1006 = sbr.rel (%p1004) target = $region160
        $region159: #{_lambda_.1} parent=131 // pred_region
          %1008 = dma.done [#allocation12], 256
        $region160: #{_lambda_.1} parent=131 // pred_fallthru
          _
        // Predicated region
        $region161: #{_lambda_.1} parent=131 // pred_check
          %p1009 = pneg %p393
        $region162: #{_lambda_.1} parent=131 // pred_check_branch
          %1011 = sbr.rel (%p1009) target = $region164
        $region163: #{_lambda_.1} parent=131 // pred_region
          %1013 = dma.done [#allocation15], 16
        $region164: #{_lambda_.1} parent=131 // pred_fallthru
          _
        // Predicated region
        $region165: #{_lambda_.1} parent=131 // pred_check
          %p1014 = pneg %p414
        $region166: #{_lambda_.1} parent=131 // pred_check_branch
          %1016 = sbr.rel (%p1014) target = $region168
        $region167: #{_lambda_.1} parent=131 // pred_region
          %1018 = dma.done [#allocation15], 256
        $region168: #{_lambda_.1} parent=131 // pred_fallthru
          _
        // Predicated region
        $region169: #{_lambda_.1} parent=131 // pred_check
          %p1019 = pneg %p435
        $region170: #{_lambda_.1} parent=131 // pred_check_branch
          %1021 = sbr.rel (%p1019) target = $region172
        $region171: #{_lambda_.1} parent=131 // pred_region
          %1023 = dma.done [#allocation18], 16
        $region172: #{_lambda_.1} parent=131 // pred_fallthru
          _
        // Predicated region
        $region173: #{_lambda_.1} parent=131 // pred_check
          %p1024 = pneg %p456
        $region174: #{_lambda_.1} parent=131 // pred_check_branch
          %1026 = sbr.rel (%p1024) target = $region176
        $region175: #{_lambda_.1} parent=131 // pred_region
          %1028 = dma.done [#allocation18], 256
        $region176: #{_lambda_.1} parent=131 // pred_fallthru
          _
        // Predicated region
        $region177: #{_lambda_.1} parent=131 // pred_check
          %p1029 = pneg %p477
        $region178: #{_lambda_.1} parent=131 // pred_check_branch
          %1031 = sbr.rel (%p1029) target = $region180
        $region179: #{_lambda_.1} parent=131 // pred_region
          %1033 = dma.done [#allocation21], 16
        $region180: #{_lambda_.1} parent=131 // pred_fallthru
          _
        // Predicated region
        $region181: #{_lambda_.1} parent=131 // pred_check
          %p1034 = pneg %p498
        $region182: #{_lambda_.1} parent=131 // pred_check_branch
          %1036 = sbr.rel (%p1034) target = $region184
        $region183: #{_lambda_.1} parent=131 // pred_region
          %1038 = dma.done [#allocation21], 16
        $region184: #{_lambda_.1} parent=131 // pred_fallthru
          _
        // Predicated region
        $region185: #{_lambda_.1} parent=131 // pred_check
          %p1039 = pneg %p519
        $region186: #{_lambda_.1} parent=131 // pred_check_branch
          %1041 = sbr.rel (%p1039) target = $region188
        $region187: #{_lambda_.1} parent=131 // pred_region
          %1043 = dma.done [#allocation24], 16
        $region188: #{_lambda_.1} parent=131 // pred_fallthru
          _
        // Predicated region
        $region189: #{_lambda_.1} parent=131 // pred_check
          %p1044 = pneg %p540
        $region190: #{_lambda_.1} parent=131 // pred_check_branch
          %1046 = sbr.rel (%p1044) target = $region192
        $region191: #{_lambda_.1} parent=131 // pred_region
          %1048 = dma.done [#allocation24], 256
        $region192: #{_lambda_.1} parent=131 // pred_fallthru
          _
        // Predicated region
        $region193: #{_lambda_.1} parent=131 // pred_check
          %p1049 = pneg %p561
        $region194: #{_lambda_.1} parent=131 // pred_check_branch
          %1051 = sbr.rel (%p1049) target = $region196
        $region195: #{_lambda_.1} parent=131 // pred_region
          %1053 = dma.done [#allocation27], 16
        $region196: #{_lambda_.1} parent=131 // pred_fallthru
          _
        // Predicated region
        $region197: #{_lambda_.1} parent=131 // pred_check
          %p1054 = pneg %p603
        $region198: #{_lambda_.1} parent=131 // pred_check_branch
          %1056 = sbr.rel (%p1054) target = $region200
        $region199: #{_lambda_.1} parent=131 // pred_region
          %1058 = dma.done [#allocation27], 16
        $region200: #{_lambda_.1} parent=131 // pred_fallthru
          _
        // Predicated region
        $region201: #{_lambda_.1} parent=131 // pred_check
          %p1059 = pneg %p624
        $region202: #{_lambda_.1} parent=131 // pred_check_branch
          %1061 = sbr.rel (%p1059) target = $region204
        $region203: #{_lambda_.1} parent=131 // pred_region
          %1063 = dma.done [#allocation30], 16
        $region204: #{_lambda_.1} parent=131 // pred_fallthru
          _
        // Predicated region
        $region205: #{_lambda_.1} parent=131 // pred_check
          %p1064 = pneg %p645
        $region206: #{_lambda_.1} parent=131 // pred_check_branch
          %1066 = sbr.rel (%p1064) target = $region208
        $region207: #{_lambda_.1} parent=131 // pred_region
          %1068 = dma.done [#allocation30], 16
        $region208: #{_lambda_.1} parent=131 // pred_fallthru
          _
        %p1069 = scmp.lt.s32.totalorder %s52, 1
        %s1070 = scalar_select %p1069, %s52, 1
        %s1071 = smul.addr %s1070, 8
        %s1072 = scalar_lea.vmem %s0, %s1071
        %p1073 = pneg %p73
        %p1074 = pneg %p70
        %p1075 = scmp.lt.s32.totalorder %s52, 1
        %s1076 = scalar_select %p1075, %s52, 1
        %s1077 = smul.addr %s1076, 8
        %s1078 = scalar_lea.vmem %s1, %s1077
        %p1079 = pneg %p99
        %p1080 = pneg %p96
        %p1081 = pneg %p120
        %p1082 = pneg %p117
        %p1083 = pneg %p141
        %p1084 = pneg %p138
        %p1085 = pneg %p162
        %p1086 = pneg %p159
        %p1087 = pneg %p183
        %p1088 = pneg %p180
        %p1089 = pneg %p204
        %p1090 = pneg %p201
        %p1091 = pneg %p225
        %p1092 = pneg %p222
        %p1093 = pneg %p246
        %p1094 = pneg %p243
        %p1095 = pneg %p267
        %p1096 = pneg %p264
        %p1097 = pneg %p288
        %p1098 = pneg %p285
        %p1099 = pneg %p309
        %p1100 = pneg %p306
        %p1101 = pneg %p330
        %p1102 = pneg %p327
        %p1103 = pneg %p351
        %p1104 = pneg %p348
        %p1105 = pneg %p372
        %p1106 = pneg %p369
        %p1107 = pneg %p393
        %p1108 = pneg %p390
        %p1109 = pneg %p414
        %p1110 = pneg %p411
        %p1111 = pneg %p435
        %p1112 = pneg %p432
        %p1113 = pneg %p456
        %p1114 = pneg %p453
        %p1115 = pneg %p477
        %p1116 = pneg %p474
        %p1117 = pneg %p498
        %p1118 = pneg %p495
        %p1119 = pneg %p519
        %p1120 = pneg %p516
        %p1121 = pneg %p540
        %p1122 = pneg %p537
        %p1123 = pneg %p561
        %p1124 = pneg %p558
        %p1125 = pneg %p582
        %p1126 = pneg %p579
        %p1127 = pneg %p603
        %p1128 = pneg %p600
        %p1129 = pneg %p624
        %p1130 = pneg %p621
        %p1131 = pneg %p645
        %p1132 = pneg %p642
        %p1133 = pneg %p671
        %p1134 = pneg %p668
        %s1135 = sand.u32 %s658, 1
        %s1136 = scalar_lea.sflag [#allocation4], %s1135
        %s1137 = sand.u32 %s658, 1
        %s1138 = smul.addr %s1137, 8
        %s1139 = scalar_lea.vmem [#allocation32], %s1138
        %p1140 = scmp.lt.s32.totalorder %s52, 1
        %s1141 = scalar_select %p1140, %s52, 1
        %s1142 = smul.addr %s1141, 8
        %s1143 = scalar_lea.vmem %s0, %s1142
        %p1144 = scmp.lt.s32.totalorder %s52, 1
        %s1145 = scalar_select %p1144, %s52, 1
        %s1146 = smul.addr %s1145, 8
        %s1147 = scalar_lea.vmem %s1, %s1146
        %v1149 = vld [vmem:[%s1143] sm:$0xff]
        %v1150 = vld [vmem:[%s2] sm:$0xf]
        %v1151 = vld [vmem:[%s2 + $0x4] sm:$0xf]
        %v1152 = vld [vmem:[%s2 + $0x8] sm:$0xf]
        %v1153 = vld [vmem:[%s2 + $0xc] sm:$0xf]
        %v1154 = vld [vmem:[%s3] sm:$0x1]
        %v1155 = vld [vmem:[%s4] sm:$0xf]
        %v1156 = vld [vmem:[%s4 + $0x4] sm:$0xf]
        %v1157 = vld [vmem:[%s4 + $0x8] sm:$0xf]
        %v1158 = vld [vmem:[%s4 + $0xc] sm:$0xf]
        %v1159 = vld [vmem:[%s5] sm:$0x1]
        %v1160 = vld [vmem:[#allocation2] sm:$0xf]
        %v1161 = vld [vmem:[#allocation2 + $0x4] sm:$0xf]
        %v1162 = vld [vmem:[#allocation2 + $0x8] sm:$0xf]
        %v1163 = vld [vmem:[#allocation2 + $0xc] sm:$0xf]
        %v1164 = vld [vmem:[%s7] sm:$0x1]
        %v1165 = vld [vmem:[#allocation5] sm:$0xf]
        %v1166 = vld [vmem:[#allocation5 + $0x4] sm:$0xf]
        %v1167 = vld [vmem:[#allocation5 + $0x8] sm:$0xf]
        %v1168 = vld [vmem:[#allocation5 + $0xc] sm:$0xf]
        %v1169 = vld [vmem:[%s9] sm:$0x1]
        %v1170 = vpack.c.bf16 %v1149, %v1149
        %v1172 = vperm.slane %v1154, 0
        %v1178 = vunpack.c.l.b16 %v1150
        %v1179 = vunpack.c.l.b16 %v1151
        %v1180 = vunpack.c.l.b16 %v1152
        %v1181 = vunpack.c.l.b16 %v1153
        %v1182 = vpack.c.b16 %v1179, %v1178
        %v1183 = vpack.c.b16 %v1181, %v1180
        %vm1186 = vcmask 261120
        %v1188 = vsel %vm1186, %v1170, 0
        %1190 = vmatpush.bf16.msra.mxu0 0
        %1191 = vmatpush.bf16.msra.mxu0 0
        %1192 = vmatpush.bf16.msra.mxu0 0
        %1193 = vmatpush.bf16.msra.mxu0 0
        %1194 = vmatpush.bf16.msra.mxu0 0
        %1195 = vmatpush.bf16.msra.mxu0 0
        %1196 = vmatpush.bf16.msra.mxu0 %v1183
        %1197 = vmatpush.bf16.msra.mxu0 %v1182
        %1198 = vmatmul.bf16.gmra.mxu0 %v1188
        %v1199 = vpop.f32.mrf.mxu0
        %v1200 = vadd.f32 %v1172, %v1199
        %v1201 = vpop.f32.mrf.mxu0
        %1202 = vdwg.mxu0
        %v1204 = vperm.slane %v1159, 0
        %v1210 = vunpack.c.l.b16 %v1155
        %v1211 = vunpack.c.l.b16 %v1156
        %v1212 = vunpack.c.l.b16 %v1157
        %v1213 = vunpack.c.l.b16 %v1158
        %v1214 = vpack.c.b16 %v1211, %v1210
        %v1215 = vpack.c.b16 %v1213, %v1212
        %1218 = vmatpush.bf16.msra.mxu0 0
        %1219 = vmatpush.bf16.msra.mxu0 0
        %1220 = vmatpush.bf16.msra.mxu0 0
        %1221 = vmatpush.bf16.msra.mxu0 0
        %1222 = vmatpush.bf16.msra.mxu0 0
        %1223 = vmatpush.bf16.msra.mxu0 0
        %1224 = vmatpush.bf16.msra.mxu0 %v1215
        %1225 = vmatpush.bf16.msra.mxu0 %v1214
        %1226 = vmatmul.bf16.gmra.mxu0 %v1188
        %v1227 = vpop.f32.mrf.mxu0
        %v1228 = vadd.f32 %v1204, %v1227
        %v1229 = vpop.f32.mrf.mxu0
        %1230 = vdwg.mxu0
        %v1232 = vperm.slane %v1164, 0
        %v1238 = vunpack.c.l.b16 %v1160
        %v1239 = vunpack.c.l.b16 %v1161
        %v1240 = vunpack.c.l.b16 %v1162
        %v1241 = vunpack.c.l.b16 %v1163
        %v1242 = vpack.c.b16 %v1239, %v1238
        %v1243 = vpack.c.b16 %v1241, %v1240
        %1246 = vmatpush.bf16.msra.mxu0 0
        %1247 = vmatpush.bf16.msra.mxu0 0
        %1248 = vmatpush.bf16.msra.mxu0 0
        %1249 = vmatpush.bf16.msra.mxu0 0
        %1250 = vmatpush.bf16.msra.mxu0 0
        %1251 = vmatpush.bf16.msra.mxu0 0
        %1252 = vmatpush.bf16.msra.mxu0 %v1243
        %1253 = vmatpush.bf16.msra.mxu0 %v1242
        %1254 = vmatmul.bf16.gmra.mxu0 %v1188
        %v1255 = vpop.f32.mrf.mxu0
        %v1256 = vadd.f32 %v1232, %v1255
        %v1257 = vpop.f32.mrf.mxu0
        %1258 = vdwg.mxu0
        %v1259 = vpack.c.bf16 %v1200, %v1200
        %v1260 = vpack.c.bf16 %v1228, %v1228
        %vm1261 = vcmask 64512
        %v1263 = vsel %vm1261, %v1259, 0
        %v1266 = vsel %vm1261, %v1260, 0
        %1268 = vmatpush.bf16.xpose.msra.mxu0 0
        %1269 = vmatpush.bf16.xpose.msra.mxu0 0
        %1270 = vmatpush.bf16.xpose.msra.mxu0 0
        %1271 = vmatpush.bf16.xpose.msra.mxu0 0
        %1272 = vmatpush.bf16.xpose.msra.mxu0 0
        %1273 = vmatpush.bf16.xpose.msra.mxu0 0
        %1274 = vmatpush.bf16.xpose.msra.mxu0 0
        %1275 = vmatpush.bf16.xpose.msra.mxu0 %v1266
        %1276 = vmatmul.bf16.gmra.mxu0 %v1263
        %v1277 = vpop.f32.mrf.mxu0
        %v1278 = vadd.f32 0.0, %v1277
        %v1279 = vpop.f32.mrf.mxu0
        %1280 = vdwg.mxu0
        %v1281 = vsel %vm1261, %v1278, -inf
        %1282 = vmax.xlane.f32.xlu0 %v1281
        %v1283 = vpop.xlane.xlu0 %1282
        %v1284 = vsub.f32 %v1278, %v1283
        %v1285 = vmul.f32 %v1284, 1.442695
        %v1286 = vpow.pop %v1285
        %v1287 = vsel %vm1261, %v1286, 0.0
        %1288 = vadd.xlane.f32.xlu0 %v1287
        %v1289 = vpop.xlane.xlu0 %1288
        %v1290 = vrcp.pop %v1289
        %v1291 = vmul.f32 %v1286, %v1290
        %v1292 = vpack.c.bf16 %v1291, %v1291
        %v1293 = vpack.c.bf16 %v1256, %v1256
        %v1295 = vsel %vm1261, %v1292, 0
        %vm1297 = vcmask 1043456
        %v1299 = vsel %vm1297, %v1293, 0
        %1301 = vmatpush.bf16.msra.mxu0 0
        %1302 = vmatpush.bf16.msra.mxu0 0
        %1303 = vmatpush.bf16.msra.mxu0 0
        %1304 = vmatpush.bf16.msra.mxu0 0
        %1305 = vmatpush.bf16.msra.mxu0 0
        %1306 = vmatpush.bf16.msra.mxu0 0
        %1307 = vmatpush.bf16.msra.mxu0 0
        %1308 = vmatpush.bf16.msra.mxu0 %v1299
        %1309 = vmatmul.bf16.gmra.mxu0 %v1295
        %v1310 = vpop.f32.mrf.mxu0
        %v1311 = vadd.f32 0.0, %v1310
        %v1312 = vpop.f32.mrf.mxu0
        %1313 = vdwg.mxu0
        %1315 = vrot.lane.b32.xlu0 %v1259, 120
        %v1316 = vpop.permute.xlu0 %1315
        %1318 = vrot.lane.b32.xlu0 %v1260, 120
        %v1319 = vpop.permute.xlu0 %1318
        %v1321 = vsel %vm1261, %v1316, 0
        %v1324 = vsel %vm1261, %v1319, 0
        %1326 = vmatpush.bf16.xpose.msra.mxu0 0
        %1327 = vmatpush.bf16.xpose.msra.mxu0 0
        %1328 = vmatpush.bf16.xpose.msra.mxu0 0
        %1329 = vmatpush.bf16.xpose.msra.mxu0 0
        %1330 = vmatpush.bf16.xpose.msra.mxu0 0
        %1331 = vmatpush.bf16.xpose.msra.mxu0 0
        %1332 = vmatpush.bf16.xpose.msra.mxu0 0
        %1333 = vmatpush.bf16.xpose.msra.mxu0 %v1324
        %1334 = vmatmul.bf16.gmra.mxu0 %v1321
        %v1335 = vpop.f32.mrf.mxu0
        %v1336 = vadd.f32 0.0, %v1335
        %v1337 = vpop.f32.mrf.mxu0
        %1338 = vdwg.mxu0
        %v1339 = vsel %vm1261, %v1336, -inf
        %1340 = vmax.xlane.f32.xlu0 %v1339
        %v1341 = vpop.xlane.xlu0 %1340
        %v1342 = vsub.f32 %v1336, %v1341
        %v1343 = vmul.f32 %v1342, 1.442695
        %v1344 = vpow.pop %v1343
        %v1345 = vsel %vm1261, %v1344, 0.0
        %1346 = vadd.xlane.f32.xlu0 %v1345
        %v1347 = vpop.xlane.xlu0 %1346
        %v1348 = vrcp.pop %v1347
        %v1349 = vmul.f32 %v1344, %v1348
        %v1350 = vpack.c.bf16 %v1349, %v1349
        %1352 = vrot.lane.b32.xlu0 %v1293, 120
        %v1353 = vpop.permute.xlu0 %1352
        %v1355 = vsel %vm1261, %v1350, 0
        %v1358 = vsel %vm1297, %v1353, 0
        %1360 = vmatpush.bf16.msra.mxu0 0
        %1361 = vmatpush.bf16.msra.mxu0 0
        %1362 = vmatpush.bf16.msra.mxu0 0
        %1363 = vmatpush.bf16.msra.mxu0 0
        %1364 = vmatpush.bf16.msra.mxu0 0
        %1365 = vmatpush.bf16.msra.mxu0 0
        %1366 = vmatpush.bf16.msra.mxu0 0
        %1367 = vmatpush.bf16.msra.mxu0 %v1358
        %1368 = vmatmul.bf16.gmra.mxu0 %v1355
        %v1369 = vpop.f32.mrf.mxu0
        %v1370 = vadd.f32 0.0, %v1369
        %v1371 = vpop.f32.mrf.mxu0
        %1372 = vdwg.mxu0
        %1373 = vrot.lane.b32.xlu0 %v1259, 112
        %v1374 = vpop.permute.xlu0 %1373
        %1375 = vrot.lane.b32.xlu0 %v1260, 112
        %v1376 = vpop.permute.xlu0 %1375
        %v1378 = vsel %vm1261, %v1374, 0
        %v1381 = vsel %vm1261, %v1376, 0
        %1383 = vmatpush.bf16.xpose.msra.mxu0 0
        %1384 = vmatpush.bf16.xpose.msra.mxu0 0
        %1385 = vmatpush.bf16.xpose.msra.mxu0 0
        %1386 = vmatpush.bf16.xpose.msra.mxu0 0
        %1387 = vmatpush.bf16.xpose.msra.mxu0 0
        %1388 = vmatpush.bf16.xpose.msra.mxu0 0
        %1389 = vmatpush.bf16.xpose.msra.mxu0 0
        %1390 = vmatpush.bf16.xpose.msra.mxu0 %v1381
        %1391 = vmatmul.bf16.gmra.mxu0 %v1378
        %v1392 = vpop.f32.mrf.mxu0
        %v1393 = vadd.f32 0.0, %v1392
        %v1394 = vpop.f32.mrf.mxu0
        %1395 = vdwg.mxu0
        %v1396 = vsel %vm1261, %v1393, -inf
        %1397 = vmax.xlane.f32.xlu0 %v1396
        %v1398 = vpop.xlane.xlu0 %1397
        %v1399 = vsub.f32 %v1393, %v1398
        %v1400 = vmul.f32 %v1399, 1.442695
        %v1401 = vpow.pop %v1400
        %v1402 = vsel %vm1261, %v1401, 0.0
        %1403 = vadd.xlane.f32.xlu0 %v1402
        %v1404 = vpop.xlane.xlu0 %1403
        %v1405 = vrcp.pop %v1404
        %v1406 = vmul.f32 %v1401, %v1405
        %v1407 = vpack.c.bf16 %v1406, %v1406
        %1408 = vrot.lane.b32.xlu0 %v1293, 112
        %v1409 = vpop.permute.xlu0 %1408
        %v1411 = vsel %vm1261, %v1407, 0
        %v1414 = vsel %vm1297, %v1409, 0
        %1416 = vmatpush.bf16.msra.mxu0 0
        %1417 = vmatpush.bf16.msra.mxu0 0
        %1418 = vmatpush.bf16.msra.mxu0 0
        %1419 = vmatpush.bf16.msra.mxu0 0
        %1420 = vmatpush.bf16.msra.mxu0 0
        %1421 = vmatpush.bf16.msra.mxu0 0
        %1422 = vmatpush.bf16.msra.mxu0 0
        %1423 = vmatpush.bf16.msra.mxu0 %v1414
        %1424 = vmatmul.bf16.gmra.mxu0 %v1411
        %v1425 = vpop.f32.mrf.mxu0
        %v1426 = vadd.f32 0.0, %v1425
        %v1427 = vpop.f32.mrf.mxu0
        %1428 = vdwg.mxu0
        %1429 = vrot.lane.b32.xlu0 %v1259, 104
        %v1430 = vpop.permute.xlu0 %1429
        %1431 = vrot.lane.b32.xlu0 %v1260, 104
        %v1432 = vpop.permute.xlu0 %1431
        %v1434 = vsel %vm1261, %v1430, 0
        %v1437 = vsel %vm1261, %v1432, 0
        %1439 = vmatpush.bf16.xpose.msra.mxu0 0
        %1440 = vmatpush.bf16.xpose.msra.mxu0 0
        %1441 = vmatpush.bf16.xpose.msra.mxu0 0
        %1442 = vmatpush.bf16.xpose.msra.mxu0 0
        %1443 = vmatpush.bf16.xpose.msra.mxu0 0
        %1444 = vmatpush.bf16.xpose.msra.mxu0 0
        %1445 = vmatpush.bf16.xpose.msra.mxu0 0
        %1446 = vmatpush.bf16.xpose.msra.mxu0 %v1437
        %1447 = vmatmul.bf16.gmra.mxu0 %v1434
        %v1448 = vpop.f32.mrf.mxu0
        %v1449 = vadd.f32 0.0, %v1448
        %v1450 = vpop.f32.mrf.mxu0
        %1451 = vdwg.mxu0
        %v1452 = vsel %vm1261, %v1449, -inf
        %1453 = vmax.xlane.f32.xlu0 %v1452
        %v1454 = vpop.xlane.xlu0 %1453
        %v1455 = vsub.f32 %v1449, %v1454
        %v1456 = vmul.f32 %v1455, 1.442695
        %v1457 = vpow.pop %v1456
        %v1458 = vsel %vm1261, %v1457, 0.0
        %1459 = vadd.xlane.f32.xlu0 %v1458
        %v1460 = vpop.xlane.xlu0 %1459
        %v1461 = vrcp.pop %v1460
        %v1462 = vmul.f32 %v1457, %v1461
        %v1463 = vpack.c.bf16 %v1462, %v1462
        %1464 = vrot.lane.b32.xlu0 %v1293, 104
        %v1465 = vpop.permute.xlu0 %1464
        %v1467 = vsel %vm1261, %v1463, 0
        %v1470 = vsel %vm1297, %v1465, 0
        %1472 = vmatpush.bf16.msra.mxu0 0
        %1473 = vmatpush.bf16.msra.mxu0 0
        %1474 = vmatpush.bf16.msra.mxu0 0
        %1475 = vmatpush.bf16.msra.mxu0 0
        %1476 = vmatpush.bf16.msra.mxu0 0
        %1477 = vmatpush.bf16.msra.mxu0 0
        %1478 = vmatpush.bf16.msra.mxu0 0
        %1479 = vmatpush.bf16.msra.mxu0 %v1470
        %1480 = vmatmul.bf16.gmra.mxu0 %v1467
        %v1481 = vpop.f32.mrf.mxu0
        %v1482 = vadd.f32 0.0, %v1481
        %v1483 = vpop.f32.mrf.mxu0
        %1484 = vdwg.mxu0
        %1486 = vrot.lane.b32.xlu0 %v1370, 8
        %v1487 = vpop.permute.xlu0 %1486
        %1490 = vrot.lane.b32.xlu0 %v1426, 16
        %v1491 = vpop.permute.xlu0 %1490
        %1494 = vrot.lane.b32.xlu0 %v1482, 24
        %v1495 = vpop.permute.xlu0 %1494
        %v1497 = vsel %vm1261, %v1311, %v1487
        %vm1498 = vcmask 130048
        %v1499 = vsel %vm1498, %v1497, %v1491
        %vm1500 = vcmask 195584
        %v1501 = vsel %vm1500, %v1499, %v1495
        %v1502 = vpack.c.bf16 %v1501, %v1501
        %v1504 = vperm.slane %v1169, 0
        %v1510 = vunpack.c.l.b16 %v1165
        %v1511 = vunpack.c.l.b16 %v1166
        %v1512 = vunpack.c.l.b16 %v1167
        %v1513 = vunpack.c.l.b16 %v1168
        %v1514 = vpack.c.b16 %v1511, %v1510
        %v1515 = vpack.c.b16 %v1513, %v1512
        %v1519 = vsel %vm1186, %v1502, 0
        %1521 = vmatpush.bf16.msra.mxu0 0
        %1522 = vmatpush.bf16.msra.mxu0 0
        %1523 = vmatpush.bf16.msra.mxu0 0
        %1524 = vmatpush.bf16.msra.mxu0 0
        %1525 = vmatpush.bf16.msra.mxu0 0
        %1526 = vmatpush.bf16.msra.mxu0 0
        %1527 = vmatpush.bf16.msra.mxu0 %v1515
        %1528 = vmatpush.bf16.msra.mxu0 %v1514
        %1529 = vmatmul.bf16.gmra.mxu0 %v1519
        %v1530 = vpop.f32.mrf.mxu0
        %v1531 = vadd.f32 %v1504, %v1530
        %v1532 = vpop.f32.mrf.mxu0
        %1533 = vdwg.mxu0
        %v1534 = vadd.f32 %v1149, %v1531
        %v1535 = vld [vmem:[#allocation7] sm:$0x1]
        %v1536 = vld [vmem:[#allocation8] sm:$0x1]
        %v1537 = vsel %vm1186, %v1534, 0.0
        %1538 = vadd.xlane.f32.xlu0 %v1537
        %v1539 = vpop.xlane.xlu0 %1538
        %v1540 = vrcp.pop 32.0
        %v1541 = vmul.f32 32.0, %v1540
        %v1542 = vsub.f32 1.0, %v1541
        %v1543 = vmul.f32 %v1540, %v1542
        %v1544 = vadd.f32 %v1540, %v1543
        %vm1545 = vweird.f32 %v1540
        %v1546 = vsel %vm1545, %v1540, %v1544
        %v1547 = vmul.f32 %v1539, %v1546
        %v1548 = vsub.f32 %v1534, %v1547
        %v1549 = vmul.f32 %v1548, %v1548
        %v1550 = vsel %vm1186, %v1549, 0.0
        %1551 = vadd.xlane.f32.xlu0 %v1550
        %v1552 = vpop.xlane.xlu0 %1551
        %v1553 = vmul.f32 %v1552, %v1546
        %v1554 = vadd.f32 %v1553, 1e-05
        %v1555 = vrsqrt.pop %v1554
        %v1556 = vmul.f32 %v1555, %v1554
        %v1557 = vmul.f32 %v1556, %v1555
        %v1558 = vmul.f32 0.5, %v1557
        %v1559 = vsub.f32 1.5, %v1558
        %v1560 = vmul.f32 %v1555, %v1559
        %vm1561 = vweird.f32 %v1554
        %vm1562 = vweird.f32 %v1555
        %vm1563 = vmor %vm1561, %vm1562
        %v1564 = vsel %vm1563, %v1555, %v1560
        %v1565 = vmul.f32 %v1548, %v1564
        %v1567 = vperm.slane %v1535, 0
        %v1569 = vmul.f32 %v1565, %v1567
        %v1571 = vperm.slane %v1536, 0
        %v1573 = vadd.f32 %v1569, %v1571
        %v1574 = vld [vmem:[%s1147] sm:$0xff]
        %v1575 = vld [vmem:[#allocation10] sm:$0xf]
        %v1576 = vld [vmem:[#allocation10 + $0x4] sm:$0xf]
        %v1577 = vld [vmem:[#allocation10 + $0x8] sm:$0xf]
        %v1578 = vld [vmem:[#allocation10 + $0xc] sm:$0xf]
        %v1579 = vld [vmem:[#allocation11] sm:$0x1]
        %v1580 = vld [vmem:[#allocation13] sm:$0xf]
        %v1581 = vld [vmem:[#allocation13 + $0x4] sm:$0xf]
        %v1582 = vld [vmem:[#allocation13 + $0x8] sm:$0xf]
        %v1583 = vld [vmem:[#allocation13 + $0xc] sm:$0xf]
        %v1584 = vld [vmem:[#allocation14] sm:$0x1]
        %v1585 = vld [vmem:[#allocation16] sm:$0xf]
        %v1586 = vld [vmem:[#allocation16 + $0x4] sm:$0xf]
        %v1587 = vld [vmem:[#allocation16 + $0x8] sm:$0xf]
        %v1588 = vld [vmem:[#allocation16 + $0xc] sm:$0xf]
        %v1589 = vld [vmem:[#allocation17] sm:$0x1]
        %v1590 = vld [vmem:[#allocation19] sm:$0xf]
        %v1591 = vld [vmem:[#allocation19 + $0x4] sm:$0xf]
        %v1592 = vld [vmem:[#allocation19 + $0x8] sm:$0xf]
        %v1593 = vld [vmem:[#allocation19 + $0xc] sm:$0xf]
        %v1594 = vld [vmem:[#allocation20] sm:$0x1]
        %v1595 = vpack.c.bf16 %v1573, %v1573
        %v1597 = vperm.slane %v1579, 0
        %v1603 = vunpack.c.l.b16 %v1575
        %v1604 = vunpack.c.l.b16 %v1576
        %v1605 = vunpack.c.l.b16 %v1577
        %v1606 = vunpack.c.l.b16 %v1578
        %v1607 = vpack.c.b16 %v1604, %v1603
        %v1608 = vpack.c.b16 %v1606, %v1605
        %v1612 = vsel %vm1186, %v1595, 0
        %1614 = vmatpush.bf16.msra.mxu0 0
        %1615 = vmatpush.bf16.msra.mxu0 0
        %1616 = vmatpush.bf16.msra.mxu0 0
        %1617 = vmatpush.bf16.msra.mxu0 0
        %1618 = vmatpush.bf16.msra.mxu0 0
        %1619 = vmatpush.bf16.msra.mxu0 0
        %1620 = vmatpush.bf16.msra.mxu0 %v1608
        %1621 = vmatpush.bf16.msra.mxu0 %v1607
        %1622 = vmatmul.bf16.gmra.mxu0 %v1612
        %v1623 = vpop.f32.mrf.mxu0
        %v1624 = vadd.f32 %v1597, %v1623
        %v1625 = vpop.f32.mrf.mxu0
        %1626 = vdwg.mxu0
        %v1627 = vpack.c.bf16 %v1574, %v1574
        %v1629 = vperm.slane %v1584, 0
        %v1635 = vunpack.c.l.b16 %v1580
        %v1636 = vunpack.c.l.b16 %v1581
        %v1637 = vunpack.c.l.b16 %v1582
        %v1638 = vunpack.c.l.b16 %v1583
        %v1639 = vpack.c.b16 %v1636, %v1635
        %v1640 = vpack.c.b16 %v1638, %v1637
        %v1644 = vsel %vm1186, %v1627, 0
        %1646 = vmatpush.bf16.msra.mxu0 0
        %1647 = vmatpush.bf16.msra.mxu0 0
        %1648 = vmatpush.bf16.msra.mxu0 0
        %1649 = vmatpush.bf16.msra.mxu0 0
        %1650 = vmatpush.bf16.msra.mxu0 0
        %1651 = vmatpush.bf16.msra.mxu0 0
        %1652 = vmatpush.bf16.msra.mxu0 %v1640
        %1653 = vmatpush.bf16.msra.mxu0 %v1639
        %1654 = vmatmul.bf16.gmra.mxu0 %v1644
        %v1655 = vpop.f32.mrf.mxu0
        %v1656 = vadd.f32 %v1629, %v1655
        %v1657 = vpop.f32.mrf.mxu0
        %1658 = vdwg.mxu0
        %v1660 = vperm.slane %v1589, 0
        %v1666 = vunpack.c.l.b16 %v1585
        %v1667 = vunpack.c.l.b16 %v1586
        %v1668 = vunpack.c.l.b16 %v1587
        %v1669 = vunpack.c.l.b16 %v1588
        %v1670 = vpack.c.b16 %v1667, %v1666
        %v1671 = vpack.c.b16 %v1669, %v1668
        %1674 = vmatpush.bf16.msra.mxu0 0
        %1675 = vmatpush.bf16.msra.mxu0 0
        %1676 = vmatpush.bf16.msra.mxu0 0
        %1677 = vmatpush.bf16.msra.mxu0 0
        %1678 = vmatpush.bf16.msra.mxu0 0
        %1679 = vmatpush.bf16.msra.mxu0 0
        %1680 = vmatpush.bf16.msra.mxu0 %v1671
        %1681 = vmatpush.bf16.msra.mxu0 %v1670
        %1682 = vmatmul.bf16.gmra.mxu0 %v1644
        %v1683 = vpop.f32.mrf.mxu0
        %v1684 = vadd.f32 %v1660, %v1683
        %v1685 = vpop.f32.mrf.mxu0
        %1686 = vdwg.mxu0
        %v1687 = vpack.c.bf16 %v1624, %v1624
        %v1688 = vpack.c.bf16 %v1656, %v1656
        %v1690 = vsel %vm1261, %v1687, 0
        %v1693 = vsel %vm1261, %v1688, 0
        %1695 = vmatpush.bf16.xpose.msra.mxu0 0
        %1696 = vmatpush.bf16.xpose.msra.mxu0 0
        %1697 = vmatpush.bf16.xpose.msra.mxu0 0
        %1698 = vmatpush.bf16.xpose.msra.mxu0 0
        %1699 = vmatpush.bf16.xpose.msra.mxu0 0
        %1700 = vmatpush.bf16.xpose.msra.mxu0 0
        %1701 = vmatpush.bf16.xpose.msra.mxu0 0
        %1702 = vmatpush.bf16.xpose.msra.mxu0 %v1693
        %1703 = vmatmul.bf16.gmra.mxu0 %v1690
        %v1704 = vpop.f32.mrf.mxu0
        %v1705 = vadd.f32 0.0, %v1704
        %v1706 = vpop.f32.mrf.mxu0
        %1707 = vdwg.mxu0
        %v1708 = vsel %vm1261, %v1705, -inf
        %1709 = vmax.xlane.f32.xlu0 %v1708
        %v1710 = vpop.xlane.xlu0 %1709
        %v1711 = vsub.f32 %v1705, %v1710
        %v1712 = vmul.f32 %v1711, 1.442695
        %v1713 = vpow.pop %v1712
        %v1714 = vsel %vm1261, %v1713, 0.0
        %1715 = vadd.xlane.f32.xlu0 %v1714
        %v1716 = vpop.xlane.xlu0 %1715
        %v1717 = vrcp.pop %v1716
        %v1718 = vmul.f32 %v1713, %v1717
        %v1719 = vpack.c.bf16 %v1718, %v1718
        %v1720 = vpack.c.bf16 %v1684, %v1684
        %v1722 = vsel %vm1261, %v1719, 0
        %v1725 = vsel %vm1297, %v1720, 0
        %1727 = vmatpush.bf16.msra.mxu0 0
        %1728 = vmatpush.bf16.msra.mxu0 0
        %1729 = vmatpush.bf16.msra.mxu0 0
        %1730 = vmatpush.bf16.msra.mxu0 0
        %1731 = vmatpush.bf16.msra.mxu0 0
        %1732 = vmatpush.bf16.msra.mxu0 0
        %1733 = vmatpush.bf16.msra.mxu0 0
        %1734 = vmatpush.bf16.msra.mxu0 %v1725
        %1735 = vmatmul.bf16.gmra.mxu0 %v1722
        %v1736 = vpop.f32.mrf.mxu0
        %v1737 = vadd.f32 0.0, %v1736
        %v1738 = vpop.f32.mrf.mxu0
        %1739 = vdwg.mxu0
        %1741 = vrot.lane.b32.xlu0 %v1687, 120
        %v1742 = vpop.permute.xlu0 %1741
        %1744 = vrot.lane.b32.xlu0 %v1688, 120
        %v1745 = vpop.permute.xlu0 %1744
        %v1747 = vsel %vm1261, %v1742, 0
        %v1750 = vsel %vm1261, %v1745, 0
        %1752 = vmatpush.bf16.xpose.msra.mxu0 0
        %1753 = vmatpush.bf16.xpose.msra.mxu0 0
        %1754 = vmatpush.bf16.xpose.msra.mxu0 0
        %1755 = vmatpush.bf16.xpose.msra.mxu0 0
        %1756 = vmatpush.bf16.xpose.msra.mxu0 0
        %1757 = vmatpush.bf16.xpose.msra.mxu0 0
        %1758 = vmatpush.bf16.xpose.msra.mxu0 0
        %1759 = vmatpush.bf16.xpose.msra.mxu0 %v1750
        %1760 = vmatmul.bf16.gmra.mxu0 %v1747
        %v1761 = vpop.f32.mrf.mxu0
        %v1762 = vadd.f32 0.0, %v1761
        %v1763 = vpop.f32.mrf.mxu0
        %1764 = vdwg.mxu0
        %v1765 = vsel %vm1261, %v1762, -inf
        %1766 = vmax.xlane.f32.xlu0 %v1765
        %v1767 = vpop.xlane.xlu0 %1766
        %v1768 = vsub.f32 %v1762, %v1767
        %v1769 = vmul.f32 %v1768, 1.442695
        %v1770 = vpow.pop %v1769
        %v1771 = vsel %vm1261, %v1770, 0.0
        %1772 = vadd.xlane.f32.xlu0 %v1771
        %v1773 = vpop.xlane.xlu0 %1772
        %v1774 = vrcp.pop %v1773
        %v1775 = vmul.f32 %v1770, %v1774
        %v1776 = vpack.c.bf16 %v1775, %v1775
        %1778 = vrot.lane.b32.xlu0 %v1720, 120
        %v1779 = vpop.permute.xlu0 %1778
        %v1781 = vsel %vm1261, %v1776, 0
        %v1784 = vsel %vm1297, %v1779, 0
        %1786 = vmatpush.bf16.msra.mxu0 0
        %1787 = vmatpush.bf16.msra.mxu0 0
        %1788 = vmatpush.bf16.msra.mxu0 0
        %1789 = vmatpush.bf16.msra.mxu0 0
        %1790 = vmatpush.bf16.msra.mxu0 0
        %1791 = vmatpush.bf16.msra.mxu0 0
        %1792 = vmatpush.bf16.msra.mxu0 0
        %1793 = vmatpush.bf16.msra.mxu0 %v1784
        %1794 = vmatmul.bf16.gmra.mxu0 %v1781
        %v1795 = vpop.f32.mrf.mxu0
        %v1796 = vadd.f32 0.0, %v1795
        %v1797 = vpop.f32.mrf.mxu0
        %1798 = vdwg.mxu0
        %1799 = vrot.lane.b32.xlu0 %v1687, 112
        %v1800 = vpop.permute.xlu0 %1799
        %1801 = vrot.lane.b32.xlu0 %v1688, 112
        %v1802 = vpop.permute.xlu0 %1801
        %v1804 = vsel %vm1261, %v1800, 0
        %v1807 = vsel %vm1261, %v1802, 0
        %1809 = vmatpush.bf16.xpose.msra.mxu0 0
        %1810 = vmatpush.bf16.xpose.msra.mxu0 0
        %1811 = vmatpush.bf16.xpose.msra.mxu0 0
        %1812 = vmatpush.bf16.xpose.msra.mxu0 0
        %1813 = vmatpush.bf16.xpose.msra.mxu0 0
        %1814 = vmatpush.bf16.xpose.msra.mxu0 0
        %1815 = vmatpush.bf16.xpose.msra.mxu0 0
        %1816 = vmatpush.bf16.xpose.msra.mxu0 %v1807
        %1817 = vmatmul.bf16.gmra.mxu0 %v1804
        %v1818 = vpop.f32.mrf.mxu0
        %v1819 = vadd.f32 0.0, %v1818
        %v1820 = vpop.f32.mrf.mxu0
        %1821 = vdwg.mxu0
        %v1822 = vsel %vm1261, %v1819, -inf
        %1823 = vmax.xlane.f32.xlu0 %v1822
        %v1824 = vpop.xlane.xlu0 %1823
        %v1825 = vsub.f32 %v1819, %v1824
        %v1826 = vmul.f32 %v1825, 1.442695
        %v1827 = vpow.pop %v1826
        %v1828 = vsel %vm1261, %v1827, 0.0
        %1829 = vadd.xlane.f32.xlu0 %v1828
        %v1830 = vpop.xlane.xlu0 %1829
        %v1831 = vrcp.pop %v1830
        %v1832 = vmul.f32 %v1827, %v1831
        %v1833 = vpack.c.bf16 %v1832, %v1832
        %1834 = vrot.lane.b32.xlu0 %v1720, 112
        %v1835 = vpop.permute.xlu0 %1834
        %v1837 = vsel %vm1261, %v1833, 0
        %v1840 = vsel %vm1297, %v1835, 0
        %1842 = vmatpush.bf16.msra.mxu0 0
        %1843 = vmatpush.bf16.msra.mxu0 0
        %1844 = vmatpush.bf16.msra.mxu0 0
        %1845 = vmatpush.bf16.msra.mxu0 0
        %1846 = vmatpush.bf16.msra.mxu0 0
        %1847 = vmatpush.bf16.msra.mxu0 0
        %1848 = vmatpush.bf16.msra.mxu0 0
        %1849 = vmatpush.bf16.msra.mxu0 %v1840
        %1850 = vmatmul.bf16.gmra.mxu0 %v1837
        %v1851 = vpop.f32.mrf.mxu0
        %v1852 = vadd.f32 0.0, %v1851
        %v1853 = vpop.f32.mrf.mxu0
        %1854 = vdwg.mxu0
        %1855 = vrot.lane.b32.xlu0 %v1687, 104
        %v1856 = vpop.permute.xlu0 %1855
        %1857 = vrot.lane.b32.xlu0 %v1688, 104
        %v1858 = vpop.permute.xlu0 %1857
        %v1860 = vsel %vm1261, %v1856, 0
        %v1863 = vsel %vm1261, %v1858, 0
        %1865 = vmatpush.bf16.xpose.msra.mxu0 0
        %1866 = vmatpush.bf16.xpose.msra.mxu0 0
        %1867 = vmatpush.bf16.xpose.msra.mxu0 0
        %1868 = vmatpush.bf16.xpose.msra.mxu0 0
        %1869 = vmatpush.bf16.xpose.msra.mxu0 0
        %1870 = vmatpush.bf16.xpose.msra.mxu0 0
        %1871 = vmatpush.bf16.xpose.msra.mxu0 0
        %1872 = vmatpush.bf16.xpose.msra.mxu0 %v1863
        %1873 = vmatmul.bf16.gmra.mxu0 %v1860
        %v1874 = vpop.f32.mrf.mxu0
        %v1875 = vadd.f32 0.0, %v1874
        %v1876 = vpop.f32.mrf.mxu0
        %1877 = vdwg.mxu0
        %v1878 = vsel %vm1261, %v1875, -inf
        %1879 = vmax.xlane.f32.xlu0 %v1878
        %v1880 = vpop.xlane.xlu0 %1879
        %v1881 = vsub.f32 %v1875, %v1880
        %v1882 = vmul.f32 %v1881, 1.442695
        %v1883 = vpow.pop %v1882
        %v1884 = vsel %vm1261, %v1883, 0.0
        %1885 = vadd.xlane.f32.xlu0 %v1884
        %v1886 = vpop.xlane.xlu0 %1885
        %v1887 = vrcp.pop %v1886
        %v1888 = vmul.f32 %v1883, %v1887
        %v1889 = vpack.c.bf16 %v1888, %v1888
        %1890 = vrot.lane.b32.xlu0 %v1720, 104
        %v1891 = vpop.permute.xlu0 %1890
        %v1893 = vsel %vm1261, %v1889, 0
        %v1896 = vsel %vm1297, %v1891, 0
        %1898 = vmatpush.bf16.msra.mxu0 0
        %1899 = vmatpush.bf16.msra.mxu0 0
        %1900 = vmatpush.bf16.msra.mxu0 0
        %1901 = vmatpush.bf16.msra.mxu0 0
        %1902 = vmatpush.bf16.msra.mxu0 0
        %1903 = vmatpush.bf16.msra.mxu0 0
        %1904 = vmatpush.bf16.msra.mxu0 0
        %1905 = vmatpush.bf16.msra.mxu0 %v1896
        %1906 = vmatmul.bf16.gmra.mxu0 %v1893
        %v1907 = vpop.f32.mrf.mxu0
        %v1908 = vadd.f32 0.0, %v1907
        %v1909 = vpop.f32.mrf.mxu0
        %1910 = vdwg.mxu0
        %1912 = vrot.lane.b32.xlu0 %v1796, 8
        %v1913 = vpop.permute.xlu0 %1912
        %1916 = vrot.lane.b32.xlu0 %v1852, 16
        %v1917 = vpop.permute.xlu0 %1916
        %1920 = vrot.lane.b32.xlu0 %v1908, 24
        %v1921 = vpop.permute.xlu0 %1920
        %v1923 = vsel %vm1261, %v1737, %v1913
        %v1924 = vsel %vm1498, %v1923, %v1917
        %v1925 = vsel %vm1500, %v1924, %v1921
        %v1926 = vpack.c.bf16 %v1925, %v1925
        %v1928 = vperm.slane %v1594, 0
        %v1934 = vunpack.c.l.b16 %v1590
        %v1935 = vunpack.c.l.b16 %v1591
        %v1936 = vunpack.c.l.b16 %v1592
        %v1937 = vunpack.c.l.b16 %v1593
        %v1938 = vpack.c.b16 %v1935, %v1934
        %v1939 = vpack.c.b16 %v1937, %v1936
        %v1943 = vsel %vm1186, %v1926, 0
        %1945 = vmatpush.bf16.msra.mxu0 0
        %1946 = vmatpush.bf16.msra.mxu0 0
        %1947 = vmatpush.bf16.msra.mxu0 0
        %1948 = vmatpush.bf16.msra.mxu0 0
        %1949 = vmatpush.bf16.msra.mxu0 0
        %1950 = vmatpush.bf16.msra.mxu0 0
        %1951 = vmatpush.bf16.msra.mxu0 %v1939
        %1952 = vmatpush.bf16.msra.mxu0 %v1938
        %1953 = vmatmul.bf16.gmra.mxu0 %v1943
        %v1954 = vpop.f32.mrf.mxu0
        %v1955 = vadd.f32 %v1928, %v1954
        %v1956 = vpop.f32.mrf.mxu0
        %1957 = vdwg.mxu0
        %v1958 = vadd.f32 %v1573, %v1955
        %v1959 = vld [vmem:[#allocation22] sm:$0x1]
        %v1960 = vld [vmem:[#allocation23] sm:$0x1]
        %v1961 = vsel %vm1186, %v1958, 0.0
        %1962 = vadd.xlane.f32.xlu0 %v1961
        %v1963 = vpop.xlane.xlu0 %1962
        %v1964 = vmul.f32 %v1963, %v1546
        %v1965 = vsub.f32 %v1958, %v1964
        %v1966 = vmul.f32 %v1965, %v1965
        %v1967 = vsel %vm1186, %v1966, 0.0
        %1968 = vadd.xlane.f32.xlu0 %v1967
        %v1969 = vpop.xlane.xlu0 %1968
        %v1970 = vmul.f32 %v1969, %v1546
        %v1971 = vadd.f32 %v1970, 1e-05
        %v1972 = vrsqrt.pop %v1971
        %v1973 = vmul.f32 %v1972, %v1971
        %v1974 = vmul.f32 %v1973, %v1972
        %v1975 = vmul.f32 0.5, %v1974
        %v1976 = vsub.f32 1.5, %v1975
        %v1977 = vmul.f32 %v1972, %v1976
        %vm1978 = vweird.f32 %v1971
        %vm1979 = vweird.f32 %v1972
        %vm1980 = vmor %vm1978, %vm1979
        %v1981 = vsel %vm1980, %v1972, %v1977
        %v1982 = vmul.f32 %v1965, %v1981
        %v1984 = vperm.slane %v1959, 0
        %v1986 = vmul.f32 %v1982, %v1984
        %v1988 = vperm.slane %v1960, 0
        %v1990 = vadd.f32 %v1986, %v1988
        %v1991 = vld [vmem:[#allocation25] sm:$0xf]
        %v1992 = vld [vmem:[#allocation25 + $0x4] sm:$0xf]
        %v1993 = vld [vmem:[#allocation25 + $0x8] sm:$0xf]
        %v1994 = vld [vmem:[#allocation25 + $0xc] sm:$0xf]
        %v1995 = vld [vmem:[#allocation26] sm:$0x1]
        %v1996 = vld [vmem:[%s24] sm:$0xf]
        %v1997 = vld [vmem:[%s24 + $0x4] sm:$0xf]
        %v1998 = vld [vmem:[%s24 + $0x8] sm:$0xf]
        %v1999 = vld [vmem:[%s24 + $0xc] sm:$0xf]
        %v2000 = vld [vmem:[%s24 + $0x10] sm:$0xf]
        %v2001 = vld [vmem:[%s24 + $0x14] sm:$0xf]
        %v2002 = vld [vmem:[%s24 + $0x18] sm:$0xf]
        %v2003 = vld [vmem:[%s24 + $0x1c] sm:$0xf]
        %v2004 = vld [vmem:[#allocation28] sm:$0x1]
        %v2005 = vpack.c.bf16 %v1990, %v1990
        %v2007 = vperm.slane %v1995, 0
        %v2013 = vunpack.c.l.b16 %v1991
        %v2014 = vunpack.c.l.b16 %v1992
        %v2015 = vunpack.c.l.b16 %v1993
        %v2016 = vunpack.c.l.b16 %v1994
        %v2017 = vpack.c.b16 %v2014, %v2013
        %v2018 = vpack.c.b16 %v2016, %v2015
        %v2022 = vsel %vm1186, %v2005, 0
        %2024 = vmatpush.bf16.msra.mxu0 0
        %2025 = vmatpush.bf16.msra.mxu0 0
        %2026 = vmatpush.bf16.msra.mxu0 0
        %2027 = vmatpush.bf16.msra.mxu0 0
        %2028 = vmatpush.bf16.msra.mxu0 0
        %2029 = vmatpush.bf16.msra.mxu0 0
        %2030 = vmatpush.bf16.msra.mxu0 %v2018
        %2031 = vmatpush.bf16.msra.mxu0 %v2017
        %2032 = vmatmul.bf16.gmra.mxu0 %v2022
        %v2033 = vpop.f32.mrf.mxu0
        %v2034 = vadd.f32 %v2007, %v2033
        %v2035 = vpop.f32.mrf.mxu0
        %2036 = vdwg.mxu0
        %v2037 = vmax.f32 %v2034, 0.0
        %v2038 = vpack.c.bf16 %v2037, %v2037
        %v2040 = vperm.slane %v2004, 0
        %v2050 = vunpack.c.l.b16 %v1996
        %v2051 = vunpack.c.l.b16 %v1997
        %v2052 = vunpack.c.l.b16 %v1998
        %v2053 = vunpack.c.l.b16 %v1999
        %v2054 = vunpack.c.l.b16 %v2000
        %v2055 = vunpack.c.l.b16 %v2001
        %v2056 = vunpack.c.l.b16 %v2002
        %v2057 = vunpack.c.l.b16 %v2003
        %v2058 = vpack.c.b16 %v2051, %v2050
        %v2059 = vpack.c.b16 %v2053, %v2052
        %v2060 = vpack.c.b16 %v2055, %v2054
        %v2061 = vpack.c.b16 %v2057, %v2056
        %vm2066 = vcmask 523264
        %v2068 = vsel %vm2066, %v2038, 0
        %2070 = vmatpush.bf16.msra.mxu0 0
        %2071 = vmatpush.bf16.msra.mxu0 0
        %2072 = vmatpush.bf16.msra.mxu0 0
        %2073 = vmatpush.bf16.msra.mxu0 0
        %2074 = vmatpush.bf16.msra.mxu0 %v2061
        %2075 = vmatpush.bf16.msra.mxu0 %v2060
        %2076 = vmatpush.bf16.msra.mxu0 %v2059
        %2077 = vmatpush.bf16.msra.mxu0 %v2058
        %2078 = vmatmul.bf16.gmra.mxu0 %v2068
        %v2079 = vpop.f32.mrf.mxu0
        %v2080 = vadd.f32 %v2040, %v2079
        %v2081 = vpop.f32.mrf.mxu0
        %2082 = vdwg.mxu0
        %v2083 = vadd.f32 %v1990, %v2080
        %v2084 = vld [vmem:[#allocation29] sm:$0x1]
        %v2085 = vld [vmem:[#allocation31] sm:$0x1]
        %v2086 = vsel %vm1186, %v2083, 0.0
        %2087 = vadd.xlane.f32.xlu0 %v2086
        %v2088 = vpop.xlane.xlu0 %2087
        %v2089 = vmul.f32 %v2088, %v1546
        %v2090 = vsub.f32 %v2083, %v2089
        %v2091 = vmul.f32 %v2090, %v2090
        %v2092 = vsel %vm1186, %v2091, 0.0
        %2093 = vadd.xlane.f32.xlu0 %v2092
        %v2094 = vpop.xlane.xlu0 %2093
        %v2095 = vmul.f32 %v2094, %v1546
        %v2096 = vadd.f32 %v2095, 1e-05
        %v2097 = vrsqrt.pop %v2096
        %v2098 = vmul.f32 %v2097, %v2096
        %v2099 = vmul.f32 %v2098, %v2097
        %v2100 = vmul.f32 0.5, %v2099
        %v2101 = vsub.f32 1.5, %v2100
        %v2102 = vmul.f32 %v2097, %v2101
        %vm2103 = vweird.f32 %v2096
        %vm2104 = vweird.f32 %v2097
        %vm2105 = vmor %vm2103, %vm2104
        %v2106 = vsel %vm2105, %v2097, %v2102
        %v2107 = vmul.f32 %v2090, %v2106
        %v2109 = vperm.slane %v2084, 0
        %v2111 = vmul.f32 %v2107, %v2109
        %v2113 = vperm.slane %v2085, 0
        %v2115 = vadd.f32 %v2111, %v2113
        %2116 = vst.msk [vmem:[%s1139] sm:$0xff] %vm1186, %v2115
        %s2117 = sand.u32 %s658, 1
        %s2118 = scalar_lea.sflag [#allocation4], %s2117
        %s2119 = sand.u32 %s658, 1
        %s2120 = smul.addr %s2119, 8
        %s2121 = scalar_lea.vmem [#allocation32], %s2120
        // Predicated region
        $region209: #{_lambda_.1} parent=131 // pred_check
          %p2122 = pneg %p668
        $region210: #{_lambda_.1} parent=131 // pred_check_branch
          %2124 = sbr.rel (%p2122) target = $region212
        $region211: #{_lambda_.1} parent=131 // pred_region
          %2126 = vsyncadd %s2118, 0
          %s2127 = smul.addr %s52, 8
          %s2128 = scalar_lea.hbm %s28, %s2127
          %s2130 = sshll.u32 %s2121, 4
          %s2131 = int_to_ptr.vmem [resolvable:$true] %s2130
          %s2132 = sshll.u32 %s2128, 4
          %s2133 = int_to_ptr.hbm [resolvable:$true] %s2132
          %2135 = dma.vmem_to_hbm [thread:$0]  %s2131, 128, %s2133, %s2118
        $region212: #{_lambda_.1} parent=131 // pred_fallthru
          _
      $region132: #{_lambda_.1} parent=5 // pred_fallthru
        _
      %p2136 = scmp.le.s32.totalorder 2, %s47
      // Predicated region
      $region213: #{_lambda_.1} parent=5 // pred_check
        %p2137 = pneg %p2136
      $region214: #{_lambda_.1} parent=5 // pred_check_branch
        %2139 = sbr.rel (%p2137) target = $region216
      $region215: #{_lambda_.1} parent=5 // pred_region
        %s2140 = ssub.s32 %s47, 2
        // Predicated region
        $region217: #{_lambda_.1} parent=215 // pred_check
          %p2141 = pneg %p674
        $region218: #{_lambda_.1} parent=215 // pred_check_branch
          %2143 = sbr.rel (%p2141) target = $region220
        $region219: #{_lambda_.1} parent=215 // pred_region
          %s2144 = sand.u32 %s659, 1
          %s2145 = scalar_lea.sflag [#allocation4], %s2144
          %s2146 = sand.u32 %s659, 1
          %s2147 = smul.addr %s2146, 8
          %s2148 = scalar_lea.vmem [#allocation32], %s2147
          %2150 = dma.done %s2145, 128
        $region220: #{_lambda_.1} parent=215 // pred_fallthru
          _
      $region216: #{_lambda_.1} parent=5 // pred_fallthru
        _
    $region6: #{_lambda_.1} parent=1 // loop_footer
      %s51 = sadd.s32 1, %s47
    $region7: #{_lambda_.1} parent=1 // loop_footer_branch
      %46 = sbr.rel target = $region3
    $region8: #{_lambda_.1} parent=1 // loop_exit
      _
    %2151 = vsyncpa [#allocation3], 1
    %s2152 = scalar_lea.sflag [#allocation3], 1
    %2153 = vsyncpa %s2152, 1
    %2154 = vsyncpa [#allocation6], 1
    %2155 = vsyncpa [#allocation9], 1
    %2156 = vsyncpa [#allocation12], 1
    %2157 = vsyncpa [#allocation15], 1
    %2158 = vsyncpa [#allocation18], 1
    %2159 = vsyncpa [#allocation21], 1
    %2160 = vsyncpa [#allocation24], 1
    %2161 = vsyncpa [#allocation27], 1
    %2162 = vsyncpa [#allocation30], 1
    %2163 = vsyncpa [#allocation4], 1
    %s2164 = scalar_lea.sflag [#allocation4], 1
    %2165 = vsyncpa %s2164, 1

</llo_original>
